<compile_context>
chip_gen: v7x
topology: tpu7x:2x2x1
jax: 0.10.0
libtpu: 0.0.40
codegen_flags: <defaults>
</compile_context>

<pallas_src>
import functools

import jax
import jax.numpy as jnp
from jax.experimental import pallas as pl
from jax.experimental.pallas import tpu as pltpu

IN_DIM = 784   # 28 * 28
H1 = 256
H2 = 32


# ---------------------------------------------------------------------------
# Fused kernel: encoder -> reparameterization -> decoder, one batch tile/step
# ---------------------------------------------------------------------------
def vae_kernel(x_ref, eps_ref,
               e_w1_ref, e_b1_ref, e_w2_ref, e_b2_ref, e_wh_ref, e_bh_ref,
               d_w1_ref, d_b1_ref, d_w2_ref, d_b2_ref, d_w3_ref, d_b3_ref,
               xhat_ref, mu_ref, lv_ref):
    z_dim = mu_ref.shape[-1]

    # ----- Encoder: 784 -> 256 -> 32 -> fused (mu | log_var) heads -----
    h = jnp.dot(x_ref[...], e_w1_ref[...], preferred_element_type=jnp.float32)
    h = jnp.maximum(h + e_b1_ref[...], 0.0)
    h = jnp.dot(h, e_w2_ref[...], preferred_element_type=jnp.float32)
    h = jnp.maximum(h + e_b2_ref[...], 0.0)

    # Single dot against the concatenated (32, 2*z_dim) head weight.
    heads = jnp.dot(h, e_wh_ref[...], preferred_element_type=jnp.float32) + e_bh_ref[...]
    mu = heads[:, :z_dim]
    log_var = heads[:, z_dim:2 * z_dim]
    mu_ref[...] = mu
    lv_ref[...] = log_var

    # ----- Reparameterization: z = mu + eps * exp(0.5 * log_var) -----
    z = mu + eps_ref[...] * jnp.exp(0.5 * log_var)

    # ----- Decoder: z -> 32 -> 256 -> 784 -> sigmoid -----
    if d_w1_ref.shape[0] == 1:
        # K == 1: broadcast outer product on the VPU (skip degenerate MXU push).
        g = z * d_w1_ref[...]
    else:
        g = jnp.dot(z, d_w1_ref[...], preferred_element_type=jnp.float32)
    g = jnp.maximum(g + d_b1_ref[...], 0.0)
    g = jnp.dot(g, d_w2_ref[...], preferred_element_type=jnp.float32)
    g = jnp.maximum(g + d_b2_ref[...], 0.0)
    g = jnp.dot(g, d_w3_ref[...], preferred_element_type=jnp.float32) + d_b3_ref[...]
    xhat_ref[...] = jax.nn.sigmoid(g)


# ---------------------------------------------------------------------------
# Parameter init (torch.nn.Linear-style uniform +-1/sqrt(fan_in))
# ---------------------------------------------------------------------------
def _init_linear(key, fan_in, fan_out):
    kw, kb = jax.random.split(key)
    bound = 1.0 / jnp.sqrt(float(fan_in))
    w = jax.random.uniform(kw, (fan_in, fan_out), jnp.float32, -bound, bound)
    b = jax.random.uniform(kb, (1, fan_out), jnp.float32, -bound, bound)
    return w, b


def init_vae_params(key, z_dim=1):
    keys = jax.random.split(key, 7)
    w_mu, b_mu = _init_linear(keys[2], H2, z_dim)
    w_var, b_var = _init_linear(keys[3], H2, z_dim)
    return {
        "e_w1": _init_linear(keys[0], IN_DIM, H1),
        "e_w2": _init_linear(keys[1], H1, H2),
        # mu / log_var heads fused along the output dim: (32, 2*z_dim)
        "e_head": (jnp.concatenate([w_mu, w_var], axis=1),
                   jnp.concatenate([b_mu, b_var], axis=1)),
        "d_w1": _init_linear(keys[4], z_dim, H2),
        "d_w2": _init_linear(keys[5], H2, H1),
        "d_w3": _init_linear(keys[6], H1, IN_DIM),
    }


# ---------------------------------------------------------------------------
# Wrapper
# ---------------------------------------------------------------------------
@functools.partial(jax.jit, static_argnames=("z_dim",))
def vae_linear_forward(params, x, eps, z_dim=1):
    """x: (B, 1, 28, 28) f32 NCHW. eps: (B, z_dim) standard normal noise.

    Returns (x_hat, mu, log_var), x_hat of shape (B, 1, 28, 28)."""
    B = x.shape[0]
    x_flat = x.reshape(B, IN_DIM)

    # Batch tile: one grid step for small B; 512-row tiles for large B
    # (x / x_hat blocks ~1.6 MB each, double-buffered + ~1.7 MB resident
    #  weights -> comfortably within scoped VMEM on v5e/v6e/v7x).
    TB = B if B <= 512 else 512
    n_tiles = pl.cdiv(B, TB)
    B_pad = n_tiles * TB
    if B_pad != B:
        x_flat = jnp.pad(x_flat, ((0, B_pad - B), (0, 0)))
        eps = jnp.pad(eps, ((0, B_pad - B), (0, 0)))

    e_w1, e_b1 = params["e_w1"]
    e_w2, e_b2 = params["e_w2"]
    e_wh, e_bh = params["e_head"]
    d_w1, d_b1 = params["d_w1"]
    d_w2, d_b2 = params["d_w2"]
    d_w3, d_b3 = params["d_w3"]
    weights = (e_w1, e_b1, e_w2, e_b2, e_wh, e_bh,
               d_w1, d_b1, d_w2, d_b2, d_w3, d_b3)

    def batch_spec(feat):
        return pl.BlockSpec((TB, feat), lambda i: (i, 0))

    def resident_spec(arr):
        # Constant block index: DMA'd once, stays resident across grid steps.
        return pl.BlockSpec(arr.shape, lambda i: (0, 0))

    n_weight_elems = sum(int(w.size) for w in weights)
    flops = 2 * B_pad * (IN_DIM * H1 + H1 * H2 + H2 * 2 * z_dim
                         + z_dim * H2 + H2 * H1 + H1 * IN_DIM)
    cost = pl.CostEstimate(
        flops=flops,
        transcendentals=B_pad * (z_dim + IN_DIM),          # exp + sigmoid
        bytes_accessed=4 * (B_pad * (2 * IN_DIM + 3 * z_dim) + n_weight_elems),
    )

    grid_spec = pltpu.PrefetchScalarGridSpec(
        num_scalar_prefetch=0,
        grid=(n_tiles,),
        in_specs=[batch_spec(IN_DIM), batch_spec(z_dim)]
                 + [resident_spec(w) for w in weights],
        out_specs=(batch_spec(IN_DIM), batch_spec(z_dim), batch_spec(z_dim)),
    )

    x_hat_p, mu_p, lv_p = pl.pallas_call(
        vae_kernel,
        out_shape=(
            jax.ShapeDtypeStruct((B_pad, IN_DIM), jnp.float32),
            jax.ShapeDtypeStruct((B_pad, z_dim), jnp.float32),
            jax.ShapeDtypeStruct((B_pad, z_dim), jnp.float32),
        ),
        grid_spec=grid_spec,
        compiler_params=pltpu.CompilerParams(
            dimension_semantics=("parallel",),
            vmem_limit_bytes=48 * 1024 * 1024,
        ),
        cost_estimate=cost,
    )(x_flat, eps, *weights)

    x_hat = x_hat_p[:B].reshape(B, 1, 28, 28)
    return x_hat, mu_p[:B], lv_p[:B]


# ---------------------------------------------------------------------------
# Pure-JAX reference for a sanity check
# ---------------------------------------------------------------------------
def vae_linear_reference(params, x, eps, z_dim=1):
    B = x.shape[0]
    h = x.reshape(B, IN_DIM)
    h = jnp.maximum(h @ params["e_w1"][0] + params["e_w1"][1], 0.0)
    h = jnp.maximum(h @ params["e_w2"][0] + params["e_w2"][1], 0.0)
    wh, bh = params["e_head"]
    mu = h @ wh[:, :z_dim] + bh[:, :z_dim]
    log_var = h @ wh[:, z_dim:] + bh[:, z_dim:]
    z = mu + eps * jnp.exp(0.5 * log_var)
    d = jnp.maximum(z @ params["d_w1"][0] + params["d_w1"][1], 0.0)
    d = jnp.maximum(d @ params["d_w2"][0] + params["d_w2"][1], 0.0)
    x_hat = jax.nn.sigmoid(d @ params["d_w3"][0] + params["d_w3"][1])
    return x_hat.reshape(B, 1, 28, 28), mu, log_var


if __name__ == "__main__":
    z_dim = 1
    B = 2

    key = jax.random.PRNGKey(0)
    k_params, k_x, k_eps = jax.random.split(key, 3)

    params = init_vae_params(k_params, z_dim=z_dim)
    x = jax.random.uniform(k_x, (B, 1, 28, 28), jnp.float32)       # NCHW in [0, 1)
    # torch.randn_like(mu) equivalent: drawn in JAX and passed into the kernel
    eps = jax.random.normal(k_eps, (B, z_dim), jnp.float32)

    x_hat, mu, log_var = vae_linear_forward(params, x, eps, z_dim=z_dim)
    jax.block_until_ready((x_hat, mu, log_var))

    r_x_hat, r_mu, r_lv = vae_linear_reference(params, x, eps, z_dim=z_dim)
    assert x_hat.shape == (B, 1, 28, 28)
    assert mu.shape == (B, z_dim) and log_var.shape == (B, z_dim)
    assert jnp.allclose(x_hat, r_x_hat, atol=1e-5)
    assert jnp.allclose(mu, r_mu, atol=1e-5)
    assert jnp.allclose(log_var, r_lv, atol=1e-5)

    print("KERNEL_OK")
</pallas_src>

<mosaic_0001>
module attributes {stable_mosaic.version = 11 : i64} {
  func.func @vae_kernel(%arg0: i32, %arg1: memref<2x784xf32, #tpu.memory_space<vmem>>, %arg2: memref<2x1xf32, #tpu.memory_space<vmem>>, %arg3: memref<784x256xf32, #tpu.memory_space<vmem>>, %arg4: memref<1x256xf32, #tpu.memory_space<vmem>>, %arg5: memref<256x32xf32, #tpu.memory_space<vmem>>, %arg6: memref<1x32xf32, #tpu.memory_space<vmem>>, %arg7: memref<32x2xf32, #tpu.memory_space<vmem>>, %arg8: memref<1x2xf32, #tpu.memory_space<vmem>>, %arg9: memref<1x32xf32, #tpu.memory_space<vmem>>, %arg10: memref<1x32xf32, #tpu.memory_space<vmem>>, %arg11: memref<32x256xf32, #tpu.memory_space<vmem>>, %arg12: memref<1x256xf32, #tpu.memory_space<vmem>>, %arg13: memref<256x784xf32, #tpu.memory_space<vmem>>, %arg14: memref<1x784xf32, #tpu.memory_space<vmem>>, %arg15: memref<2x784xf32, #tpu.memory_space<vmem>>, %arg16: memref<2x1xf32, #tpu.memory_space<vmem>>, %arg17: memref<2x1xf32, #tpu.memory_space<vmem>>) attributes {dimension_semantics = [#tpu.dimension_semantics<parallel>], iteration_bounds = array<i64: 1>, scalar_prefetch = 0 : i64, scratch_operands = 0 : i64, tpu.core_type = #tpu.core_type<tc>, window_params = [{transform_indices = @transform_0, window_bounds = array<i64: 2, 784>}, {transform_indices = @transform_1, window_bounds = array<i64: 2, 1>}, {pipeline_mode = #tpu.pipeline_mode<synchronous>, transform_indices = @transform_2, window_bounds = array<i64: 784, 256>}, {pipeline_mode = #tpu.pipeline_mode<synchronous>, transform_indices = @transform_3, window_bounds = array<i64: 1, 256>}, {pipeline_mode = #tpu.pipeline_mode<synchronous>, transform_indices = @transform_4, window_bounds = array<i64: 256, 32>}, {pipeline_mode = #tpu.pipeline_mode<synchronous>, transform_indices = @transform_5, window_bounds = array<i64: 1, 32>}, {pipeline_mode = #tpu.pipeline_mode<synchronous>, transform_indices = @transform_6, window_bounds = array<i64: 32, 2>}, {pipeline_mode = #tpu.pipeline_mode<synchronous>, transform_indices = @transform_7, window_bounds = array<i64: 1, 2>}, {pipeline_mode = #tpu.pipeline_mode<synchronous>, transform_indices = @transform_8, window_bounds = array<i64: 1, 32>}, {pipeline_mode = #tpu.pipeline_mode<synchronous>, transform_indices = @transform_9, window_bounds = array<i64: 1, 32>}, {pipeline_mode = #tpu.pipeline_mode<synchronous>, transform_indices = @transform_10, window_bounds = array<i64: 32, 256>}, {pipeline_mode = #tpu.pipeline_mode<synchronous>, transform_indices = @transform_11, window_bounds = array<i64: 1, 256>}, {pipeline_mode = #tpu.pipeline_mode<synchronous>, transform_indices = @transform_12, window_bounds = array<i64: 256, 784>}, {pipeline_mode = #tpu.pipeline_mode<synchronous>, transform_indices = @transform_13, window_bounds = array<i64: 1, 784>}, {transform_indices = @transform_14, window_bounds = array<i64: 2, 784>}, {transform_indices = @transform_15, window_bounds = array<i64: 2, 1>}, {transform_indices = @transform_16, window_bounds = array<i64: 2, 1>}]} {
    %c0 = arith.constant 0 : index
    %c0_0 = arith.constant 0 : index
    %0 = vector.load %arg1[%c0, %c0_0] : memref<2x784xf32, #tpu.memory_space<vmem>>, vector<2x784xf32>
    %c0_1 = arith.constant 0 : index
    %c0_2 = arith.constant 0 : index
    %1 = vector.load %arg3[%c0_1, %c0_2] : memref<784x256xf32, #tpu.memory_space<vmem>>, vector<784x256xf32>
    %cst = arith.constant dense<0.000000e+00> : vector<2x256xf32>
    %2 = tpu.matmul %0, %1, %cst {dimension_numbers = #tpu.dot_dimension_numbers<[1], [0], [0], [1], [0, 0, 1, 1], [], []>} : vector<2x784xf32>, vector<784x256xf32>, vector<2x256xf32> -> vector<2x256xf32>
    %c0_3 = arith.constant 0 : index
    %c0_4 = arith.constant 0 : index
    %3 = vector.load %arg4[%c0_3, %c0_4] : memref<1x256xf32, #tpu.memory_space<vmem>>, vector<1x256xf32>
    %4 = vector.broadcast %3 : vector<1x256xf32> to vector<2x256xf32>
    %5 = arith.addf %2, %4 : vector<2x256xf32>
    %cst_5 = arith.constant 0.000000e+00 : f32
    %6 = vector.broadcast %cst_5 : f32 to vector<2x256xf32>
    %7 = arith.maximumf %5, %6 : vector<2x256xf32>
    %c0_6 = arith.constant 0 : index
    %c0_7 = arith.constant 0 : index
    %8 = vector.load %arg5[%c0_6, %c0_7] : memref<256x32xf32, #tpu.memory_space<vmem>>, vector<256x32xf32>
    %cst_8 = arith.constant dense<0.000000e+00> : vector<2x32xf32>
    %9 = tpu.matmul %7, %8, %cst_8 {dimension_numbers = #tpu.dot_dimension_numbers<[1], [0], [0], [1], [0, 0, 1, 1], [], []>} : vector<2x256xf32>, vector<256x32xf32>, vector<2x32xf32> -> vector<2x32xf32>
    %c0_9 = arith.constant 0 : index
    %c0_10 = arith.constant 0 : index
    %10 = vector.load %arg6[%c0_9, %c0_10] : memref<1x32xf32, #tpu.memory_space<vmem>>, vector<1x32xf32>
    %11 = vector.broadcast %10 : vector<1x32xf32> to vector<2x32xf32>
    %12 = arith.addf %9, %11 : vector<2x32xf32>
    %cst_11 = arith.constant 0.000000e+00 : f32
    %13 = vector.broadcast %cst_11 : f32 to vector<2x32xf32>
    %14 = arith.maximumf %12, %13 : vector<2x32xf32>
    %c0_12 = arith.constant 0 : index
    %c0_13 = arith.constant 0 : index
    %15 = vector.load %arg7[%c0_12, %c0_13] : memref<32x2xf32, #tpu.memory_space<vmem>>, vector<32x2xf32>
    %cst_14 = arith.constant dense<0.000000e+00> : vector<2x2xf32>
    %16 = tpu.matmul %14, %15, %cst_14 {dimension_numbers = #tpu.dot_dimension_numbers<[1], [0], [0], [1], [0, 0, 1, 1], [], []>} : vector<2x32xf32>, vector<32x2xf32>, vector<2x2xf32> -> vector<2x2xf32>
    %c0_15 = arith.constant 0 : index
    %c0_16 = arith.constant 0 : index
    %17 = vector.load %arg8[%c0_15, %c0_16] : memref<1x2xf32, #tpu.memory_space<vmem>>, vector<1x2xf32>
    %18 = vector.broadcast %17 : vector<1x2xf32> to vector<2x2xf32>
    %19 = arith.addf %16, %18 : vector<2x2xf32>
    %20 = vector.extract_strided_slice %19 {offsets = [0, 0], sizes = [2, 1], strides = [1, 1]} : vector<2x2xf32> to vector<2x1xf32>
    %21 = vector.extract_strided_slice %19 {offsets = [0, 1], sizes = [2, 1], strides = [1, 1]} : vector<2x2xf32> to vector<2x1xf32>
    %c0_17 = arith.constant 0 : index
    %c0_18 = arith.constant 0 : index
    %22 = vector.load %arg16[%c0_17, %c0_18] : memref<2x1xf32, #tpu.memory_space<vmem>>, vector<2x1xf32>
    tpu.vector_store %arg16[%c0_17, %c0_18], %20 {strides = array<i32>} : memref<2x1xf32, #tpu.memory_space<vmem>>, vector<2x1xf32>,
    %c0_19 = arith.constant 0 : index
    %c0_20 = arith.constant 0 : index
    %23 = vector.load %arg17[%c0_19, %c0_20] : memref<2x1xf32, #tpu.memory_space<vmem>>, vector<2x1xf32>
    tpu.vector_store %arg17[%c0_19, %c0_20], %21 {strides = array<i32>} : memref<2x1xf32, #tpu.memory_space<vmem>>, vector<2x1xf32>,
    %c0_21 = arith.constant 0 : index
    %c0_22 = arith.constant 0 : index
    %24 = vector.load %arg2[%c0_21, %c0_22] : memref<2x1xf32, #tpu.memory_space<vmem>>, vector<2x1xf32>
    %cst_23 = arith.constant 5.000000e-01 : f32
    %25 = vector.broadcast %cst_23 : f32 to vector<2x1xf32>
    %26 = arith.mulf %25, %21 : vector<2x1xf32>
    %27 = math.exp %26 : vector<2x1xf32>
    %28 = arith.mulf %24, %27 : vector<2x1xf32>
    %29 = arith.addf %20, %28 : vector<2x1xf32>
    %c0_24 = arith.constant 0 : index
    %c0_25 = arith.constant 0 : index
    %30 = vector.load %arg9[%c0_24, %c0_25] : memref<1x32xf32, #tpu.memory_space<vmem>>, vector<1x32xf32>
    %31 = vector.broadcast %29 : vector<2x1xf32> to vector<2x32xf32>
    %32 = vector.broadcast %30 : vector<1x32xf32> to vector<2x32xf32>
    %33 = arith.mulf %31, %32 : vector<2x32xf32>
    %c0_26 = arith.constant 0 : index
    %c0_27 = arith.constant 0 : index
    %34 = vector.load %arg10[%c0_26, %c0_27] : memref<1x32xf32, #tpu.memory_space<vmem>>, vector<1x32xf32>
    %35 = vector.broadcast %34 : vector<1x32xf32> to vector<2x32xf32>
    %36 = arith.addf %33, %35 : vector<2x32xf32>
    %cst_28 = arith.constant 0.000000e+00 : f32
    %37 = vector.broadcast %cst_28 : f32 to vector<2x32xf32>
    %38 = arith.maximumf %36, %37 : vector<2x32xf32>
    %c0_29 = arith.constant 0 : index
    %c0_30 = arith.constant 0 : index
    %39 = vector.load %arg11[%c0_29, %c0_30] : memref<32x256xf32, #tpu.memory_space<vmem>>, vector<32x256xf32>
    %cst_31 = arith.constant dense<0.000000e+00> : vector<2x256xf32>
    %40 = tpu.matmul %38, %39, %cst_31 {dimension_numbers = #tpu.dot_dimension_numbers<[1], [0], [0], [1], [0, 0, 1, 1], [], []>} : vector<2x32xf32>, vector<32x256xf32>, vector<2x256xf32> -> vector<2x256xf32>
    %c0_32 = arith.constant 0 : index
    %c0_33 = arith.constant 0 : index
    %41 = vector.load %arg12[%c0_32, %c0_33] : memref<1x256xf32, #tpu.memory_space<vmem>>, vector<1x256xf32>
    %42 = vector.broadcast %41 : vector<1x256xf32> to vector<2x256xf32>
    %43 = arith.addf %40, %42 : vector<2x256xf32>
    %cst_34 = arith.constant 0.000000e+00 : f32
    %44 = vector.broadcast %cst_34 : f32 to vector<2x256xf32>
    %45 = arith.maximumf %43, %44 : vector<2x256xf32>
    %c0_35 = arith.constant 0 : index
    %c0_36 = arith.constant 0 : index
    %46 = vector.load %arg13[%c0_35, %c0_36] : memref<256x784xf32, #tpu.memory_space<vmem>>, vector<256x784xf32>
    %cst_37 = arith.constant dense<0.000000e+00> : vector<2x784xf32>
    %47 = tpu.matmul %45, %46, %cst_37 {dimension_numbers = #tpu.dot_dimension_numbers<[1], [0], [0], [1], [0, 0, 1, 1], [], []>} : vector<2x256xf32>, vector<256x784xf32>, vector<2x784xf32> -> vector<2x784xf32>
    %c0_38 = arith.constant 0 : index
    %c0_39 = arith.constant 0 : index
    %48 = vector.load %arg14[%c0_38, %c0_39] : memref<1x784xf32, #tpu.memory_space<vmem>>, vector<1x784xf32>
    %49 = vector.broadcast %48 : vector<1x784xf32> to vector<2x784xf32>
    %50 = arith.addf %47, %49 : vector<2x784xf32>
    %51 = arith.negf %50 : vector<2x784xf32>
    %52 = math.exp %51 : vector<2x784xf32>
    %cst_40 = arith.constant 1.000000e+00 : f32
    %53 = vector.broadcast %cst_40 : f32 to vector<2x784xf32>
    %54 = arith.addf %53, %52 : vector<2x784xf32>
    %55 = arith.divf %53, %54 : vector<2x784xf32>
    %c0_41 = arith.constant 0 : index
    %c0_42 = arith.constant 0 : index
    %56 = vector.load %arg15[%c0_41, %c0_42] : memref<2x784xf32, #tpu.memory_space<vmem>>, vector<2x784xf32>
    tpu.vector_store %arg15[%c0_41, %c0_42], %55 {strides = array<i32>} : memref<2x784xf32, #tpu.memory_space<vmem>>, vector<2x784xf32>,
    return
  }
  func.func @transform_0(%arg0: i32) -> (i32, i32) {
    %c0_i32 = arith.constant 0 : i32
    %c0_i32_0 = arith.constant 0 : i32
    return %arg0, %c0_i32 : i32, i32
  }
  func.func @transform_1(%arg0: i32) -> (i32, i32) {
    %c0_i32 = arith.constant 0 : i32
    %c0_i32_0 = arith.constant 0 : i32
    return %arg0, %c0_i32 : i32, i32
  }
  func.func @transform_2(%arg0: i32) -> (i32, i32) {
    %c0_i32 = arith.constant 0 : i32
    %c0_i32_0 = arith.constant 0 : i32
    %c0_i32_1 = arith.constant 0 : i32
    return %c0_i32, %c0_i32_0 : i32, i32
  }
  func.func @transform_3(%arg0: i32) -> (i32, i32) {
    %c0_i32 = arith.constant 0 : i32
    %c0_i32_0 = arith.constant 0 : i32
    %c0_i32_1 = arith.constant 0 : i32
    return %c0_i32, %c0_i32_0 : i32, i32
  }
  func.func @transform_4(%arg0: i32) -> (i32, i32) {
    %c0_i32 = arith.constant 0 : i32
    %c0_i32_0 = arith.constant 0 : i32
    %c0_i32_1 = arith.constant 0 : i32
    return %c0_i32, %c0_i32_0 : i32, i32
  }
  func.func @transform_5(%arg0: i32) -> (i32, i32) {
    %c0_i32 = arith.constant 0 : i32
    %c0_i32_0 = arith.constant 0 : i32
    %c0_i32_1 = arith.constant 0 : i32
    return %c0_i32, %c0_i32_0 : i32, i32
  }
  func.func @transform_6(%arg0: i32) -> (i32, i32) {
    %c0_i32 = arith.constant 0 : i32
    %c0_i32_0 = arith.constant 0 : i32
    %c0_i32_1 = arith.constant 0 : i32
    return %c0_i32, %c0_i32_0 : i32, i32
  }
  func.func @transform_7(%arg0: i32) -> (i32, i32) {
    %c0_i32 = arith.constant 0 : i32
    %c0_i32_0 = arith.constant 0 : i32
    %c0_i32_1 = arith.constant 0 : i32
    return %c0_i32, %c0_i32_0 : i32, i32
  }
  func.func @transform_8(%arg0: i32) -> (i32, i32) {
    %c0_i32 = arith.constant 0 : i32
    %c0_i32_0 = arith.constant 0 : i32
    %c0_i32_1 = arith.constant 0 : i32
    return %c0_i32, %c0_i32_0 : i32, i32
  }
  func.func @transform_9(%arg0: i32) -> (i32, i32) {
    %c0_i32 = arith.constant 0 : i32
    %c0_i32_0 = arith.constant 0 : i32
    %c0_i32_1 = arith.constant 0 : i32
    return %c0_i32, %c0_i32_0 : i32, i32
  }
  func.func @transform_10(%arg0: i32) -> (i32, i32) {
    %c0_i32 = arith.constant 0 : i32
    %c0_i32_0 = arith.constant 0 : i32
    %c0_i32_1 = arith.constant 0 : i32
    return %c0_i32, %c0_i32_0 : i32, i32
  }
  func.func @transform_11(%arg0: i32) -> (i32, i32) {
    %c0_i32 = arith.constant 0 : i32
    %c0_i32_0 = arith.constant 0 : i32
    %c0_i32_1 = arith.constant 0 : i32
    return %c0_i32, %c0_i32_0 : i32, i32
  }
  func.func @transform_12(%arg0: i32) -> (i32, i32) {
    %c0_i32 = arith.constant 0 : i32
    %c0_i32_0 = arith.constant 0 : i32
    %c0_i32_1 = arith.constant 0 : i32
    return %c0_i32, %c0_i32_0 : i32, i32
  }
  func.func @transform_13(%arg0: i32) -> (i32, i32) {
    %c0_i32 = arith.constant 0 : i32
    %c0_i32_0 = arith.constant 0 : i32
    %c0_i32_1 = arith.constant 0 : i32
    return %c0_i32, %c0_i32_0 : i32, i32
  }
  func.func @transform_14(%arg0: i32) -> (i32, i32) {
    %c0_i32 = arith.constant 0 : i32
    %c0_i32_0 = arith.constant 0 : i32
    return %arg0, %c0_i32 : i32, i32
  }
  func.func @transform_15(%arg0: i32) -> (i32, i32) {
    %c0_i32 = arith.constant 0 : i32
    %c0_i32_0 = arith.constant 0 : i32
    return %arg0, %c0_i32 : i32, i32
  }
  func.func @transform_16(%arg0: i32) -> (i32, i32) {
    %c0_i32 = arith.constant 0 : i32
    %c0_i32_0 = arith.constant 0 : i32
    return %arg0, %c0_i32 : i32, i32
  }
}

</mosaic_0001>

<llo_original>
// kernel: vae_linear_forward.1
$region0: #{vae_linear_forward.1}
  #allocation0 [shape = 'u32[]', space=smem, size = 0x4, offset = 0x4, fixed_abs, tag = 'smem constant byte address 0x4 - core index']
  #allocation1 [shape = 'u32[144,128]{1,0:T(1,128)}', space=vmem, size = 0x12000, scoped, tag = 'internal scratch']
  %s0 = inlined_call_operand.vmem [shape: f32[2,784], index: 0, kind: input, shape index: {}]
  %s1 = inlined_call_operand.vmem [shape: f32[2,1], index: 1, kind: input, shape index: {}]
  %s2 = inlined_call_operand.vmem [shape: f32[784,256], index: 2, kind: input, shape index: {}]
  %s3 = inlined_call_operand.vmem [shape: f32[1,256], index: 3, kind: input, shape index: {}]
  %s4 = inlined_call_operand.vmem [shape: f32[256,32], index: 4, kind: input, shape index: {}]
  %s5 = inlined_call_operand.vmem [shape: f32[1,32], index: 5, kind: input, shape index: {}]
  %s6 = inlined_call_operand.vmem [shape: f32[32,2], index: 6, kind: input, shape index: {}]
  %s7 = inlined_call_operand.vmem [shape: f32[1,2], index: 7, kind: input, shape index: {}]
  %s8 = inlined_call_operand.vmem [shape: f32[1,32], index: 8, kind: input, shape index: {}]
  %s9 = inlined_call_operand.vmem [shape: f32[1,32], index: 9, kind: input, shape index: {}]
  %s10 = inlined_call_operand.vmem [shape: f32[32,256], index: 10, kind: input, shape index: {}]
  %s11 = inlined_call_operand.vmem [shape: f32[1,256], index: 11, kind: input, shape index: {}]
  %s12 = inlined_call_operand.vmem [shape: f32[256,784], index: 12, kind: input, shape index: {}]
  %s13 = inlined_call_operand.vmem [shape: f32[1,784], index: 13, kind: input, shape index: {}]
  %s14 = inlined_call_operand.vmem [shape: f32[2,784], index: 14, kind: output, shape index: {0}]
  %s15 = inlined_call_operand.vmem [shape: f32[2,1], index: 15, kind: output, shape index: {1}]
  %s16 = inlined_call_operand.vmem [shape: f32[2,1], index: 16, kind: output, shape index: {2}]
  %17 = xla_tuple %s14, %s15, %s16
  %s18 = sld [smem:[#allocation0]]
  $region82: #{vae_linear_forward.1} parent=0
    _
  %s20 = ssub.s32 1, %s18
  %s21 = scalar_select 0, %s20, %s18
  // Predicated region
  $region2: #{vae_linear_forward.1} parent=0 // pred_check
    _
  $region3: #{vae_linear_forward.1} parent=0 // pred_check_branch
    %23 = sbr.rel (0) target = $region5
  $region4: #{vae_linear_forward.1} parent=0 // pred_region
    _
  $region5: #{vae_linear_forward.1} parent=0 // pred_fallthru
    _
  // Predicated region
  $region6: #{vae_linear_forward.1} parent=0 // pred_check
    _
  $region7: #{vae_linear_forward.1} parent=0 // pred_check_branch
    %25 = sbr.rel (0) target = $region9
  $region8: #{vae_linear_forward.1} parent=0 // pred_region
    _
  $region9: #{vae_linear_forward.1} parent=0 // pred_fallthru
    _
  // Predicated region
  $region10: #{vae_linear_forward.1} parent=0 // pred_check
    _
  $region11: #{vae_linear_forward.1} parent=0 // pred_check_branch
    %27 = sbr.rel (0) target = $region13
  $region12: #{vae_linear_forward.1} parent=0 // pred_region
    _
  $region13: #{vae_linear_forward.1} parent=0 // pred_fallthru
    _
  // Predicated region
  $region14: #{vae_linear_forward.1} parent=0 // pred_check
    _
  $region15: #{vae_linear_forward.1} parent=0 // pred_check_branch
    %29 = sbr.rel (0) target = $region17
  $region16: #{vae_linear_forward.1} parent=0 // pred_region
    _
  $region17: #{vae_linear_forward.1} parent=0 // pred_fallthru
    _
  // Predicated region
  $region18: #{vae_linear_forward.1} parent=0 // pred_check
    _
  $region19: #{vae_linear_forward.1} parent=0 // pred_check_branch
    %31 = sbr.rel (0) target = $region21
  $region20: #{vae_linear_forward.1} parent=0 // pred_region
    _
  $region21: #{vae_linear_forward.1} parent=0 // pred_fallthru
    _
  // Predicated region
  $region22: #{vae_linear_forward.1} parent=0 // pred_check
    _
  $region23: #{vae_linear_forward.1} parent=0 // pred_check_branch
    %33 = sbr.rel (0) target = $region25
  $region24: #{vae_linear_forward.1} parent=0 // pred_region
    _
  $region25: #{vae_linear_forward.1} parent=0 // pred_fallthru
    _
  // Predicated region
  $region26: #{vae_linear_forward.1} parent=0 // pred_check
    _
  $region27: #{vae_linear_forward.1} parent=0 // pred_check_branch
    %35 = sbr.rel (0) target = $region29
  $region28: #{vae_linear_forward.1} parent=0 // pred_region
    _
  $region29: #{vae_linear_forward.1} parent=0 // pred_fallthru
    _
  // Predicated region
  $region30: #{vae_linear_forward.1} parent=0 // pred_check
    _
  $region31: #{vae_linear_forward.1} parent=0 // pred_check_branch
    %37 = sbr.rel (0) target = $region33
  $region32: #{vae_linear_forward.1} parent=0 // pred_region
    _
  $region33: #{vae_linear_forward.1} parent=0 // pred_fallthru
    _
  // Predicated region
  $region34: #{vae_linear_forward.1} parent=0 // pred_check
    _
  $region35: #{vae_linear_forward.1} parent=0 // pred_check_branch
    %39 = sbr.rel (0) target = $region37
  $region36: #{vae_linear_forward.1} parent=0 // pred_region
    _
  $region37: #{vae_linear_forward.1} parent=0 // pred_fallthru
    _
  // Predicated region
  $region38: #{vae_linear_forward.1} parent=0 // pred_check
    _
  $region39: #{vae_linear_forward.1} parent=0 // pred_check_branch
    %41 = sbr.rel (0) target = $region41
  $region40: #{vae_linear_forward.1} parent=0 // pred_region
    _
  $region41: #{vae_linear_forward.1} parent=0 // pred_fallthru
    _
  // Predicated region
  $region42: #{vae_linear_forward.1} parent=0 // pred_check
    _
  $region43: #{vae_linear_forward.1} parent=0 // pred_check_branch
    %43 = sbr.rel (0) target = $region45
  $region44: #{vae_linear_forward.1} parent=0 // pred_region
    _
  $region45: #{vae_linear_forward.1} parent=0 // pred_fallthru
    _
  // Predicated region
  $region46: #{vae_linear_forward.1} parent=0 // pred_check
    _
  $region47: #{vae_linear_forward.1} parent=0 // pred_check_branch
    %45 = sbr.rel (0) target = $region49
  $region48: #{vae_linear_forward.1} parent=0 // pred_region
    _
  $region49: #{vae_linear_forward.1} parent=0 // pred_fallthru
    _
  // Predicated region
  $region50: #{vae_linear_forward.1} parent=0 // pred_check
    _
  $region51: #{vae_linear_forward.1} parent=0 // pred_check_branch
    %47 = sbr.rel (0) target = $region53
  $region52: #{vae_linear_forward.1} parent=0 // pred_region
    _
  $region53: #{vae_linear_forward.1} parent=0 // pred_fallthru
    _
  // Predicated region
  $region54: #{vae_linear_forward.1} parent=0 // pred_check
    _
  $region55: #{vae_linear_forward.1} parent=0 // pred_check_branch
    %49 = sbr.rel (0) target = $region57
  $region56: #{vae_linear_forward.1} parent=0 // pred_region
    _
  $region57: #{vae_linear_forward.1} parent=0 // pred_fallthru
    _
  %v50 = vld [vmem:[%s0] sm:$0xff]
  %v51 = vld [vmem:[%s0 + $0x8] sm:$0x3f]
  %v52 = vld [vmem:[%s2] sm:$0xff]
  %v53 = vld [vmem:[%s2 + $0x8] sm:$0xff]
  %v54 = vld [vmem:[%s2 + $0x10] sm:$0xff]
  %v55 = vld [vmem:[%s2 + $0x18] sm:$0xff]
  %v56 = vld [vmem:[%s2 + $0x20] sm:$0xff]
  %v57 = vld [vmem:[%s2 + $0x28] sm:$0xff]
  %v58 = vld [vmem:[%s2 + $0x30] sm:$0xff]
  %v59 = vld [vmem:[%s2 + $0x38] sm:$0xff]
  %v60 = vld [vmem:[%s2 + $0x40] sm:$0xff]
  %v61 = vld [vmem:[%s2 + $0x48] sm:$0xff]
  %v62 = vld [vmem:[%s2 + $0x50] sm:$0xff]
  %v63 = vld [vmem:[%s2 + $0x58] sm:$0xff]
  %v64 = vld [vmem:[%s2 + $0x60] sm:$0xff]
  %v65 = vld [vmem:[%s2 + $0x68] sm:$0xff]
  %v66 = vld [vmem:[%s2 + $0x70] sm:$0xff]
  %v67 = vld [vmem:[%s2 + $0x78] sm:$0xff]
  %v68 = vld [vmem:[%s2 + $0x80] sm:$0xff]
  %v69 = vld [vmem:[%s2 + $0x88] sm:$0xff]
  %v70 = vld [vmem:[%s2 + $0x90] sm:$0xff]
  %v71 = vld [vmem:[%s2 + $0x98] sm:$0xff]
  %v72 = vld [vmem:[%s2 + $0xa0] sm:$0xff]
  %v73 = vld [vmem:[%s2 + $0xa8] sm:$0xff]
  %v74 = vld [vmem:[%s2 + $0xb0] sm:$0xff]
  %v75 = vld [vmem:[%s2 + $0xb8] sm:$0xff]
  %v76 = vld [vmem:[%s2 + $0xc0] sm:$0xff]
  %v77 = vld [vmem:[%s2 + $0xc8] sm:$0xff]
  %v78 = vld [vmem:[%s2 + $0xd0] sm:$0xff]
  %v79 = vld [vmem:[%s2 + $0xd8] sm:$0xff]
  %v80 = vld [vmem:[%s2 + $0xe0] sm:$0xff]
  %v81 = vld [vmem:[%s2 + $0xe8] sm:$0xff]
  %v82 = vld [vmem:[%s2 + $0xf0] sm:$0xff]
  %v83 = vld [vmem:[%s2 + $0xf8] sm:$0xff]
  %v84 = vld [vmem:[%s2 + $0x100] sm:$0xff]
  %v85 = vld [vmem:[%s2 + $0x108] sm:$0xff]
  %v86 = vld [vmem:[%s2 + $0x110] sm:$0xff]
  %v87 = vld [vmem:[%s2 + $0x118] sm:$0xff]
  %v88 = vld [vmem:[%s2 + $0x120] sm:$0xff]
  %v89 = vld [vmem:[%s2 + $0x128] sm:$0xff]
  %v90 = vld [vmem:[%s2 + $0x130] sm:$0xff]
  %v91 = vld [vmem:[%s2 + $0x138] sm:$0xff]
  %v92 = vld [vmem:[%s2 + $0x140] sm:$0xff]
  %v93 = vld [vmem:[%s2 + $0x148] sm:$0xff]
  %v94 = vld [vmem:[%s2 + $0x150] sm:$0xff]
  %v95 = vld [vmem:[%s2 + $0x158] sm:$0xff]
  %v96 = vld [vmem:[%s2 + $0x160] sm:$0xff]
  %v97 = vld [vmem:[%s2 + $0x168] sm:$0xff]
  %v98 = vld [vmem:[%s2 + $0x170] sm:$0xff]
  %v99 = vld [vmem:[%s2 + $0x178] sm:$0xff]
  %v100 = vld [vmem:[%s2 + $0x180] sm:$0xff]
  %v101 = vld [vmem:[%s2 + $0x188] sm:$0xff]
  %v102 = vld [vmem:[%s2 + $0x190] sm:$0xff]
  %v103 = vld [vmem:[%s2 + $0x198] sm:$0xff]
  %v104 = vld [vmem:[%s2 + $0x1a0] sm:$0xff]
  %v105 = vld [vmem:[%s2 + $0x1a8] sm:$0xff]
  %v106 = vld [vmem:[%s2 + $0x1b0] sm:$0xff]
  %v107 = vld [vmem:[%s2 + $0x1b8] sm:$0xff]
  %v108 = vld [vmem:[%s2 + $0x1c0] sm:$0xff]
  %v109 = vld [vmem:[%s2 + $0x1c8] sm:$0xff]
  %v110 = vld [vmem:[%s2 + $0x1d0] sm:$0xff]
  %v111 = vld [vmem:[%s2 + $0x1d8] sm:$0xff]
  %v112 = vld [vmem:[%s2 + $0x1e0] sm:$0xff]
  %v113 = vld [vmem:[%s2 + $0x1e8] sm:$0xff]
  %v114 = vld [vmem:[%s2 + $0x1f0] sm:$0xff]
  %v115 = vld [vmem:[%s2 + $0x1f8] sm:$0xff]
  %v116 = vld [vmem:[%s2 + $0x200] sm:$0xff]
  %v117 = vld [vmem:[%s2 + $0x208] sm:$0xff]
  %v118 = vld [vmem:[%s2 + $0x210] sm:$0xff]
  %v119 = vld [vmem:[%s2 + $0x218] sm:$0xff]
  %v120 = vld [vmem:[%s2 + $0x220] sm:$0xff]
  %v121 = vld [vmem:[%s2 + $0x228] sm:$0xff]
  %v122 = vld [vmem:[%s2 + $0x230] sm:$0xff]
  %v123 = vld [vmem:[%s2 + $0x238] sm:$0xff]
  %v124 = vld [vmem:[%s2 + $0x240] sm:$0xff]
  %v125 = vld [vmem:[%s2 + $0x248] sm:$0xff]
  %v126 = vld [vmem:[%s2 + $0x250] sm:$0xff]
  %v127 = vld [vmem:[%s2 + $0x258] sm:$0xff]
  %v128 = vld [vmem:[%s2 + $0x260] sm:$0xff]
  %v129 = vld [vmem:[%s2 + $0x268] sm:$0xff]
  %v130 = vld [vmem:[%s2 + $0x270] sm:$0xff]
  %v131 = vld [vmem:[%s2 + $0x278] sm:$0xff]
  %v132 = vld [vmem:[%s2 + $0x280] sm:$0xff]
  %v133 = vld [vmem:[%s2 + $0x288] sm:$0xff]
  %v134 = vld [vmem:[%s2 + $0x290] sm:$0xff]
  %v135 = vld [vmem:[%s2 + $0x298] sm:$0xff]
  %v136 = vld [vmem:[%s2 + $0x2a0] sm:$0xff]
  %v137 = vld [vmem:[%s2 + $0x2a8] sm:$0xff]
  %v138 = vld [vmem:[%s2 + $0x2b0] sm:$0xff]
  %v139 = vld [vmem:[%s2 + $0x2b8] sm:$0xff]
  %v140 = vld [vmem:[%s2 + $0x2c0] sm:$0xff]
  %v141 = vld [vmem:[%s2 + $0x2c8] sm:$0xff]
  %v142 = vld [vmem:[%s2 + $0x2d0] sm:$0xff]
  %v143 = vld [vmem:[%s2 + $0x2d8] sm:$0xff]
  %v144 = vld [vmem:[%s2 + $0x2e0] sm:$0xff]
  %v145 = vld [vmem:[%s2 + $0x2e8] sm:$0xff]
  %v146 = vld [vmem:[%s2 + $0x2f0] sm:$0xff]
  %v147 = vld [vmem:[%s2 + $0x2f8] sm:$0xff]
  %v148 = vld [vmem:[%s2 + $0x300] sm:$0xff]
  %v149 = vld [vmem:[%s2 + $0x308] sm:$0xff]
  %v150 = vld [vmem:[%s2 + $0x310] sm:$0xff]
  %v151 = vld [vmem:[%s2 + $0x318] sm:$0xff]
  %v152 = vld [vmem:[%s2 + $0x320] sm:$0xff]
  %v153 = vld [vmem:[%s2 + $0x328] sm:$0xff]
  %v154 = vld [vmem:[%s2 + $0x330] sm:$0xff]
  %v155 = vld [vmem:[%s2 + $0x338] sm:$0xff]
  %v156 = vld [vmem:[%s2 + $0x340] sm:$0xff]
  %v157 = vld [vmem:[%s2 + $0x348] sm:$0xff]
  %v158 = vld [vmem:[%s2 + $0x350] sm:$0xff]
  %v159 = vld [vmem:[%s2 + $0x358] sm:$0xff]
  %v160 = vld [vmem:[%s2 + $0x360] sm:$0xff]
  %v161 = vld [vmem:[%s2 + $0x368] sm:$0xff]
  %v162 = vld [vmem:[%s2 + $0x370] sm:$0xff]
  %v163 = vld [vmem:[%s2 + $0x378] sm:$0xff]
  %v164 = vld [vmem:[%s2 + $0x380] sm:$0xff]
  %v165 = vld [vmem:[%s2 + $0x388] sm:$0xff]
  %v166 = vld [vmem:[%s2 + $0x390] sm:$0xff]
  %v167 = vld [vmem:[%s2 + $0x398] sm:$0xff]
  %v168 = vld [vmem:[%s2 + $0x3a0] sm:$0xff]
  %v169 = vld [vmem:[%s2 + $0x3a8] sm:$0xff]
  %v170 = vld [vmem:[%s2 + $0x3b0] sm:$0xff]
  %v171 = vld [vmem:[%s2 + $0x3b8] sm:$0xff]
  %v172 = vld [vmem:[%s2 + $0x3c0] sm:$0xff]
  %v173 = vld [vmem:[%s2 + $0x3c8] sm:$0xff]
  %v174 = vld [vmem:[%s2 + $0x3d0] sm:$0xff]
  %v175 = vld [vmem:[%s2 + $0x3d8] sm:$0xff]
  %v176 = vld [vmem:[%s2 + $0x3e0] sm:$0xff]
  %v177 = vld [vmem:[%s2 + $0x3e8] sm:$0xff]
  %v178 = vld [vmem:[%s2 + $0x3f0] sm:$0xff]
  %v179 = vld [vmem:[%s2 + $0x3f8] sm:$0xff]
  %v180 = vld [vmem:[%s2 + $0x400] sm:$0xff]
  %v181 = vld [vmem:[%s2 + $0x408] sm:$0xff]
  %v182 = vld [vmem:[%s2 + $0x410] sm:$0xff]
  %v183 = vld [vmem:[%s2 + $0x418] sm:$0xff]
  %v184 = vld [vmem:[%s2 + $0x420] sm:$0xff]
  %v185 = vld [vmem:[%s2 + $0x428] sm:$0xff]
  %v186 = vld [vmem:[%s2 + $0x430] sm:$0xff]
  %v187 = vld [vmem:[%s2 + $0x438] sm:$0xff]
  %v188 = vld [vmem:[%s2 + $0x440] sm:$0xff]
  %v189 = vld [vmem:[%s2 + $0x448] sm:$0xff]
  %v190 = vld [vmem:[%s2 + $0x450] sm:$0xff]
  %v191 = vld [vmem:[%s2 + $0x458] sm:$0xff]
  %v192 = vld [vmem:[%s2 + $0x460] sm:$0xff]
  %v193 = vld [vmem:[%s2 + $0x468] sm:$0xff]
  %v194 = vld [vmem:[%s2 + $0x470] sm:$0xff]
  %v195 = vld [vmem:[%s2 + $0x478] sm:$0xff]
  %v196 = vld [vmem:[%s2 + $0x480] sm:$0xff]
  %v197 = vld [vmem:[%s2 + $0x488] sm:$0xff]
  %v198 = vld [vmem:[%s2 + $0x490] sm:$0xff]
  %v199 = vld [vmem:[%s2 + $0x498] sm:$0xff]
  %v200 = vld [vmem:[%s2 + $0x4a0] sm:$0xff]
  %v201 = vld [vmem:[%s2 + $0x4a8] sm:$0xff]
  %v202 = vld [vmem:[%s2 + $0x4b0] sm:$0xff]
  %v203 = vld [vmem:[%s2 + $0x4b8] sm:$0xff]
  %v204 = vld [vmem:[%s2 + $0x4c0] sm:$0xff]
  %v205 = vld [vmem:[%s2 + $0x4c8] sm:$0xff]
  %v206 = vld [vmem:[%s2 + $0x4d0] sm:$0xff]
  %v207 = vld [vmem:[%s2 + $0x4d8] sm:$0xff]
  %v208 = vld [vmem:[%s2 + $0x4e0] sm:$0xff]
  %v209 = vld [vmem:[%s2 + $0x4e8] sm:$0xff]
  %v210 = vld [vmem:[%s2 + $0x4f0] sm:$0xff]
  %v211 = vld [vmem:[%s2 + $0x4f8] sm:$0xff]
  %v212 = vld [vmem:[%s2 + $0x500] sm:$0xff]
  %v213 = vld [vmem:[%s2 + $0x508] sm:$0xff]
  %v214 = vld [vmem:[%s2 + $0x510] sm:$0xff]
  %v215 = vld [vmem:[%s2 + $0x518] sm:$0xff]
  %v216 = vld [vmem:[%s2 + $0x520] sm:$0xff]
  %v217 = vld [vmem:[%s2 + $0x528] sm:$0xff]
  %v218 = vld [vmem:[%s2 + $0x530] sm:$0xff]
  %v219 = vld [vmem:[%s2 + $0x538] sm:$0xff]
  %v220 = vld [vmem:[%s2 + $0x540] sm:$0xff]
  %v221 = vld [vmem:[%s2 + $0x548] sm:$0xff]
  %v222 = vld [vmem:[%s2 + $0x550] sm:$0xff]
  %v223 = vld [vmem:[%s2 + $0x558] sm:$0xff]
  %v224 = vld [vmem:[%s2 + $0x560] sm:$0xff]
  %v225 = vld [vmem:[%s2 + $0x568] sm:$0xff]
  %v226 = vld [vmem:[%s2 + $0x570] sm:$0xff]
  %v227 = vld [vmem:[%s2 + $0x578] sm:$0xff]
  %v228 = vld [vmem:[%s2 + $0x580] sm:$0xff]
  %v229 = vld [vmem:[%s2 + $0x588] sm:$0xff]
  %v230 = vld [vmem:[%s2 + $0x590] sm:$0xff]
  %v231 = vld [vmem:[%s2 + $0x598] sm:$0xff]
  %v232 = vld [vmem:[%s2 + $0x5a0] sm:$0xff]
  %v233 = vld [vmem:[%s2 + $0x5a8] sm:$0xff]
  %v234 = vld [vmem:[%s2 + $0x5b0] sm:$0xff]
  %v235 = vld [vmem:[%s2 + $0x5b8] sm:$0xff]
  %v236 = vld [vmem:[%s2 + $0x5c0] sm:$0xff]
  %v237 = vld [vmem:[%s2 + $0x5c8] sm:$0xff]
  %v238 = vld [vmem:[%s2 + $0x5d0] sm:$0xff]
  %v239 = vld [vmem:[%s2 + $0x5d8] sm:$0xff]
  %v240 = vld [vmem:[%s2 + $0x5e0] sm:$0xff]
  %v241 = vld [vmem:[%s2 + $0x5e8] sm:$0xff]
  %v242 = vld [vmem:[%s2 + $0x5f0] sm:$0xff]
  %v243 = vld [vmem:[%s2 + $0x5f8] sm:$0xff]
  %v244 = vld [vmem:[%s2 + $0x600] sm:$0xff]
  %v245 = vld [vmem:[%s2 + $0x608] sm:$0xff]
  %v246 = vld [vmem:[%s2 + $0x610] sm:$0xff]
  %v247 = vld [vmem:[%s2 + $0x618] sm:$0xff]
  %v248 = vld [vmem:[%s3] sm:$0x3]
  %v250 = vlaneseq
  %v251 = vshrl.u32 %v250, 7
  %v252 = vsub.s32 0, %v251
  %v253 = vrot.slane %v248, %v252
  %v254 = vlaneseq
  %v255 = vshrl.u32 %v254, 7
  %v256 = vsub.s32 1, %v255
  %v257 = vrot.slane %v248, %v256
  %v262 = vcombine.high %v50, %v50
  %v264 = vunpack.c.l.s4 1983009808
  %v265 = vunpack.c.0.s8 %v264
  %v266 = vlaneseq
  %v267 = vshrl.u32 %v266, 7
  %v268 = vsub.s32 %v265, %v267
  %v269 = vrot.slane %v50, %v268
  %v271 = vunpack.c.l.s4 1983009808
  %v272 = vunpack.c.0.s8 %v271
  %v273 = vlaneseq
  %v274 = vshrl.u32 %v273, 7
  %v275 = vsub.s32 %v272, %v274
  %v276 = vrot.slane %v262, %v275
  %v277 = vcombine.high %v269, %v269
  %v278 = vcombine.high %v276, %v276
  %v279 = vcombine.high %v51, %v51
  %v281 = vunpack.c.l.s4 1983009808
  %v282 = vunpack.c.0.s8 %v281
  %v283 = vlaneseq
  %v284 = vshrl.u32 %v283, 7
  %v285 = vsub.s32 %v282, %v284
  %v286 = vrot.slane %v51, %v285
  %v288 = vunpack.c.l.s4 1983009808
  %v289 = vunpack.c.0.s8 %v288
  %v290 = vlaneseq
  %v291 = vshrl.u32 %v290, 7
  %v292 = vsub.s32 %v289, %v291
  %v293 = vrot.slane %v279, %v292
  %v294 = vcombine.high %v286, %v286
  %vm301 = vcmask 130048
  %v302 = vsel %vm301, %v293, 0
  %304 = vmatprep.subr.mxu0 %v53
  %305 = vmatpush1.msra.mxu0 %v52
  %306 = vmatprep.subr.mxu0 %v55
  %307 = vmatpush1.msra.mxu0 %v54
  %308 = vmatprep.subr.mxu0 %v57
  %309 = vmatpush1.msra.mxu0 %v56
  %310 = vmatprep.subr.mxu0 %v59
  %311 = vmatpush1.msra.mxu0 %v58
  %312 = vmatprep.subr.mxu0 %v61
  %313 = vmatpush1.msra.mxu0 %v60
  %314 = vmatprep.subr.mxu0 %v63
  %315 = vmatpush1.msra.mxu0 %v62
  %316 = vmatprep.subr.mxu0 %v65
  %317 = vmatpush1.msra.mxu0 %v64
  %318 = vmatprep.subr.mxu0 %v67
  %319 = vmatpush1.msra.mxu0 %v66
  %320 = vmatprep.subr.mxu0 %v69
  %321 = vmatpush1.msra.mxu0 %v68
  %322 = vmatprep.subr.mxu0 %v71
  %323 = vmatpush1.msra.mxu0 %v70
  %324 = vmatprep.subr.mxu0 %v73
  %325 = vmatpush1.msra.mxu0 %v72
  %326 = vmatprep.subr.mxu0 %v75
  %327 = vmatpush1.msra.mxu0 %v74
  %328 = vmatprep.subr.mxu0 %v77
  %329 = vmatpush1.msra.mxu0 %v76
  %330 = vmatprep.subr.mxu0 %v79
  %331 = vmatpush1.msra.mxu0 %v78
  %332 = vmatprep.subr.mxu0 %v81
  %333 = vmatpush1.msra.mxu0 %v80
  %334 = vmatprep.subr.mxu0 %v83
  %335 = vmatpush1.msra.mxu0 %v82
  %336 = vmatprep.subr.mxu0 %v85
  %337 = vmatpush1.msra.mxu0 %v84
  %338 = vmatprep.subr.mxu0 %v87
  %339 = vmatpush1.msra.mxu0 %v86
  %340 = vmatprep.subr.mxu0 %v89
  %341 = vmatpush1.msra.mxu0 %v88
  %342 = vmatprep.subr.mxu0 %v91
  %343 = vmatpush1.msra.mxu0 %v90
  %344 = vmatprep.subr.mxu0 %v93
  %345 = vmatpush1.msra.mxu0 %v92
  %346 = vmatprep.subr.mxu0 %v95
  %347 = vmatpush1.msra.mxu0 %v94
  %348 = vmatprep.subr.mxu0 %v97
  %349 = vmatpush1.msra.mxu0 %v96
  %350 = vmatprep.subr.mxu0 %v99
  %351 = vmatpush1.msra.mxu0 %v98
  %352 = vmatprep.subr.mxu0 %v101
  %353 = vmatpush1.msra.mxu0 %v100
  %354 = vmatprep.subr.mxu0 %v103
  %355 = vmatpush1.msra.mxu0 %v102
  %356 = vmatprep.subr.mxu0 %v105
  %357 = vmatpush1.msra.mxu0 %v104
  %358 = vmatprep.subr.mxu0 %v107
  %359 = vmatpush1.msra.mxu0 %v106
  %360 = vmatprep.subr.mxu0 %v109
  %361 = vmatpush1.msra.mxu0 %v108
  %362 = vmatprep.subr.mxu0 %v111
  %363 = vmatpush1.msra.mxu0 %v110
  %364 = vmatprep.subr.mxu0 %v113
  %365 = vmatpush1.msra.mxu0 %v112
  %366 = vmatprep.subr.mxu0 %v115
  %367 = vmatpush1.msra.mxu0 %v114
  %368 = vmatprep.mubr.f32.mxu0 %v277
  %369 = vmatmul.mubr.f32.gmra.mrb[0].mxu0 %v269
  %v370 = vpop.f32.mrb[0].mxu0
  %v371 = vadd.f32 %v253, %v370
  %v372 = vpop.f32.mrb[0].mxu0
  %v373 = vadd.f32 %v257, %v372
  %374 = vdwg.mxu0
  %375 = vmatprep.subr.mxu0 %v117
  %376 = vmatpush1.msra.mxu0 %v116
  %377 = vmatprep.subr.mxu0 %v119
  %378 = vmatpush1.msra.mxu0 %v118
  %379 = vmatprep.subr.mxu0 %v121
  %380 = vmatpush1.msra.mxu0 %v120
  %381 = vmatprep.subr.mxu0 %v123
  %382 = vmatpush1.msra.mxu0 %v122
  %383 = vmatprep.subr.mxu0 %v125
  %384 = vmatpush1.msra.mxu0 %v124
  %385 = vmatprep.subr.mxu0 %v127
  %386 = vmatpush1.msra.mxu0 %v126
  %387 = vmatprep.subr.mxu0 %v129
  %388 = vmatpush1.msra.mxu0 %v128
  %389 = vmatprep.subr.mxu0 %v131
  %390 = vmatpush1.msra.mxu0 %v130
  %391 = vmatprep.subr.mxu0 %v133
  %392 = vmatpush1.msra.mxu0 %v132
  %393 = vmatprep.subr.mxu0 %v135
  %394 = vmatpush1.msra.mxu0 %v134
  %395 = vmatprep.subr.mxu0 %v137
  %396 = vmatpush1.msra.mxu0 %v136
  %397 = vmatprep.subr.mxu0 %v139
  %398 = vmatpush1.msra.mxu0 %v138
  %399 = vmatprep.subr.mxu0 %v141
  %400 = vmatpush1.msra.mxu0 %v140
  %401 = vmatprep.subr.mxu0 %v143
  %402 = vmatpush1.msra.mxu0 %v142
  %403 = vmatprep.subr.mxu0 %v145
  %404 = vmatpush1.msra.mxu0 %v144
  %405 = vmatprep.subr.mxu0 %v147
  %406 = vmatpush1.msra.mxu0 %v146
  %407 = vmatprep.subr.mxu0 %v149
  %408 = vmatpush1.msra.mxu0 %v148
  %409 = vmatprep.subr.mxu0 %v151
  %410 = vmatpush1.msra.mxu0 %v150
  %411 = vmatprep.subr.mxu0 %v153
  %412 = vmatpush1.msra.mxu0 %v152
  %413 = vmatprep.subr.mxu0 %v155
  %414 = vmatpush1.msra.mxu0 %v154
  %415 = vmatprep.subr.mxu0 %v157
  %416 = vmatpush1.msra.mxu0 %v156
  %417 = vmatprep.subr.mxu0 %v159
  %418 = vmatpush1.msra.mxu0 %v158
  %419 = vmatprep.subr.mxu0 %v161
  %420 = vmatpush1.msra.mxu0 %v160
  %421 = vmatprep.subr.mxu0 %v163
  %422 = vmatpush1.msra.mxu0 %v162
  %423 = vmatprep.subr.mxu0 %v165
  %424 = vmatpush1.msra.mxu0 %v164
  %425 = vmatprep.subr.mxu0 %v167
  %426 = vmatpush1.msra.mxu0 %v166
  %427 = vmatprep.subr.mxu0 %v169
  %428 = vmatpush1.msra.mxu0 %v168
  %429 = vmatprep.subr.mxu0 %v171
  %430 = vmatpush1.msra.mxu0 %v170
  %431 = vmatprep.subr.mxu0 %v173
  %432 = vmatpush1.msra.mxu0 %v172
  %433 = vmatprep.subr.mxu0 %v175
  %434 = vmatpush1.msra.mxu0 %v174
  %435 = vmatprep.subr.mxu0 %v177
  %436 = vmatpush1.msra.mxu0 %v176
  %437 = vmatprep.subr.mxu0 %v179
  %438 = vmatpush1.msra.mxu0 %v178
  %439 = vmatprep.mubr.f32.mxu0 %v278
  %440 = vmatmul.mubr.f32.gmra.mrb[0].mxu0 %v276
  %v441 = vpop.f32.mrb[0].mxu0
  %v442 = vadd.f32 %v371, %v441
  %v443 = vpop.f32.mrb[0].mxu0
  %v444 = vadd.f32 %v373, %v443
  %445 = vdwg.mxu0
  %446 = vmatprep.subr.mxu0 %v181
  %447 = vmatpush1.msra.mxu0 %v180
  %448 = vmatprep.subr.mxu0 %v183
  %449 = vmatpush1.msra.mxu0 %v182
  %450 = vmatprep.subr.mxu0 %v185
  %451 = vmatpush1.msra.mxu0 %v184
  %452 = vmatprep.subr.mxu0 %v187
  %453 = vmatpush1.msra.mxu0 %v186
  %454 = vmatprep.subr.mxu0 %v189
  %455 = vmatpush1.msra.mxu0 %v188
  %456 = vmatprep.subr.mxu0 %v191
  %457 = vmatpush1.msra.mxu0 %v190
  %458 = vmatprep.subr.mxu0 %v193
  %459 = vmatpush1.msra.mxu0 %v192
  %460 = vmatprep.subr.mxu0 %v195
  %461 = vmatpush1.msra.mxu0 %v194
  %462 = vmatprep.subr.mxu0 %v197
  %463 = vmatpush1.msra.mxu0 %v196
  %464 = vmatprep.subr.mxu0 %v199
  %465 = vmatpush1.msra.mxu0 %v198
  %466 = vmatprep.subr.mxu0 %v201
  %467 = vmatpush1.msra.mxu0 %v200
  %468 = vmatprep.subr.mxu0 %v203
  %469 = vmatpush1.msra.mxu0 %v202
  %470 = vmatprep.subr.mxu0 %v205
  %471 = vmatpush1.msra.mxu0 %v204
  %472 = vmatprep.subr.mxu0 %v207
  %473 = vmatpush1.msra.mxu0 %v206
  %474 = vmatprep.subr.mxu0 %v209
  %475 = vmatpush1.msra.mxu0 %v208
  %476 = vmatprep.subr.mxu0 %v211
  %477 = vmatpush1.msra.mxu0 %v210
  %478 = vmatprep.subr.mxu0 %v213
  %479 = vmatpush1.msra.mxu0 %v212
  %480 = vmatprep.subr.mxu0 %v215
  %481 = vmatpush1.msra.mxu0 %v214
  %482 = vmatprep.subr.mxu0 %v217
  %483 = vmatpush1.msra.mxu0 %v216
  %484 = vmatprep.subr.mxu0 %v219
  %485 = vmatpush1.msra.mxu0 %v218
  %486 = vmatprep.subr.mxu0 %v221
  %487 = vmatpush1.msra.mxu0 %v220
  %488 = vmatprep.subr.mxu0 %v223
  %489 = vmatpush1.msra.mxu0 %v222
  %490 = vmatprep.subr.mxu0 %v225
  %491 = vmatpush1.msra.mxu0 %v224
  %492 = vmatprep.subr.mxu0 %v227
  %493 = vmatpush1.msra.mxu0 %v226
  %494 = vmatprep.subr.mxu0 %v229
  %495 = vmatpush1.msra.mxu0 %v228
  %496 = vmatprep.subr.mxu0 %v231
  %497 = vmatpush1.msra.mxu0 %v230
  %498 = vmatprep.subr.mxu0 %v233
  %499 = vmatpush1.msra.mxu0 %v232
  %500 = vmatprep.subr.mxu0 %v235
  %501 = vmatpush1.msra.mxu0 %v234
  %502 = vmatprep.subr.mxu0 %v237
  %503 = vmatpush1.msra.mxu0 %v236
  %504 = vmatprep.subr.mxu0 %v239
  %505 = vmatpush1.msra.mxu0 %v238
  %506 = vmatprep.subr.mxu0 %v241
  %507 = vmatpush1.msra.mxu0 %v240
  %508 = vmatprep.subr.mxu0 %v243
  %509 = vmatpush1.msra.mxu0 %v242
  %510 = vmatprep.mubr.f32.mxu0 %v294
  %511 = vmatmul.mubr.f32.gmra.mrb[0].mxu0 %v286
  %v512 = vpop.f32.mrb[0].mxu0
  %v513 = vadd.f32 %v442, %v512
  %v514 = vpop.f32.mrb[0].mxu0
  %v515 = vadd.f32 %v444, %v514
  %516 = vdwg.mxu0
  %517 = vmatprep.subr.mxu0 %v245
  %518 = vmatpush1.msra.mxu0 %v244
  %519 = vmatprep.subr.mxu0 %v247
  %520 = vmatpush1.msra.mxu0 %v246
  %521 = vmatprep.subr.mxu0 0.0
  %522 = vmatpush1.msra.mxu0 0.0
  %523 = vmatprep.subr.mxu0 0.0
  %524 = vmatpush1.msra.mxu0 0.0
  %525 = vmatprep.subr.mxu0 0.0
  %526 = vmatpush1.msra.mxu0 0.0
  %527 = vmatprep.subr.mxu0 0.0
  %528 = vmatpush1.msra.mxu0 0.0
  %529 = vmatprep.subr.mxu0 0.0
  %530 = vmatpush1.msra.mxu0 0.0
  %531 = vmatprep.subr.mxu0 0.0
  %532 = vmatpush1.msra.mxu0 0.0
  %533 = vmatprep.subr.mxu0 0.0
  %534 = vmatpush1.msra.mxu0 0.0
  %535 = vmatprep.subr.mxu0 0.0
  %536 = vmatpush1.msra.mxu0 0.0
  %537 = vmatprep.subr.mxu0 0.0
  %538 = vmatpush1.msra.mxu0 0.0
  %539 = vmatprep.subr.mxu0 0.0
  %540 = vmatpush1.msra.mxu0 0.0
  %541 = vmatprep.subr.mxu0 0.0
  %542 = vmatpush1.msra.mxu0 0.0
  %543 = vmatprep.subr.mxu0 0.0
  %544 = vmatpush1.msra.mxu0 0.0
  %545 = vmatprep.subr.mxu0 0.0
  %546 = vmatpush1.msra.mxu0 0.0
  %547 = vmatprep.subr.mxu0 0.0
  %548 = vmatpush1.msra.mxu0 0.0
  %549 = vmatprep.subr.mxu0 0.0
  %550 = vmatpush1.msra.mxu0 0.0
  %551 = vmatprep.subr.mxu0 0.0
  %552 = vmatpush1.msra.mxu0 0.0
  %553 = vmatprep.subr.mxu0 0.0
  %554 = vmatpush1.msra.mxu0 0.0
  %555 = vmatprep.subr.mxu0 0.0
  %556 = vmatpush1.msra.mxu0 0.0
  %557 = vmatprep.subr.mxu0 0.0
  %558 = vmatpush1.msra.mxu0 0.0
  %559 = vmatprep.subr.mxu0 0.0
  %560 = vmatpush1.msra.mxu0 0.0
  %561 = vmatprep.subr.mxu0 0.0
  %562 = vmatpush1.msra.mxu0 0.0
  %563 = vmatprep.subr.mxu0 0.0
  %564 = vmatpush1.msra.mxu0 0.0
  %565 = vmatprep.subr.mxu0 0.0
  %566 = vmatpush1.msra.mxu0 0.0
  %567 = vmatprep.subr.mxu0 0.0
  %568 = vmatpush1.msra.mxu0 0.0
  %569 = vmatprep.subr.mxu0 0.0
  %570 = vmatpush1.msra.mxu0 0.0
  %571 = vmatprep.subr.mxu0 0.0
  %572 = vmatpush1.msra.mxu0 0.0
  %573 = vmatprep.subr.mxu0 0.0
  %574 = vmatpush1.msra.mxu0 0.0
  %575 = vmatprep.subr.mxu0 0.0
  %576 = vmatpush1.msra.mxu0 0.0
  %577 = vmatprep.subr.mxu0 0.0
  %578 = vmatpush1.msra.mxu0 0.0
  %579 = vmatprep.subr.mxu0 0.0
  %580 = vmatpush1.msra.mxu0 0.0
  %581 = vmatprep.mubr.f32.mxu0 0.0
  %582 = vmatmul.mubr.f32.gmra.mrb[0].mxu0 %v302
  %v583 = vpop.f32.mrb[0].mxu0
  %v584 = vadd.f32 %v513, %v583
  %v585 = vpop.f32.mrb[0].mxu0
  %v586 = vadd.f32 %v515, %v585
  %587 = vdwg.mxu0
  %v588 = vmax.f32 %v584, 0.0
  %v589 = vmax.f32 %v586, 0.0
  %v590 = vld [vmem:[%s4] sm:$0xff]
  %v591 = vld [vmem:[%s4 + $0x8] sm:$0xff]
  %v592 = vld [vmem:[%s4 + $0x10] sm:$0xff]
  %v593 = vld [vmem:[%s4 + $0x18] sm:$0xff]
  %v594 = vld [vmem:[%s4 + $0x20] sm:$0xff]
  %v595 = vld [vmem:[%s4 + $0x28] sm:$0xff]
  %v596 = vld [vmem:[%s4 + $0x30] sm:$0xff]
  %v597 = vld [vmem:[%s4 + $0x38] sm:$0xff]
  %v598 = vld [vmem:[%s4 + $0x40] sm:$0xff]
  %v599 = vld [vmem:[%s4 + $0x48] sm:$0xff]
  %v600 = vld [vmem:[%s4 + $0x50] sm:$0xff]
  %v601 = vld [vmem:[%s4 + $0x58] sm:$0xff]
  %v602 = vld [vmem:[%s4 + $0x60] sm:$0xff]
  %v603 = vld [vmem:[%s4 + $0x68] sm:$0xff]
  %v604 = vld [vmem:[%s4 + $0x70] sm:$0xff]
  %v605 = vld [vmem:[%s4 + $0x78] sm:$0xff]
  %v606 = vld [vmem:[%s4 + $0x80] sm:$0xff]
  %v607 = vld [vmem:[%s4 + $0x88] sm:$0xff]
  %v608 = vld [vmem:[%s4 + $0x90] sm:$0xff]
  %v609 = vld [vmem:[%s4 + $0x98] sm:$0xff]
  %v610 = vld [vmem:[%s4 + $0xa0] sm:$0xff]
  %v611 = vld [vmem:[%s4 + $0xa8] sm:$0xff]
  %v612 = vld [vmem:[%s4 + $0xb0] sm:$0xff]
  %v613 = vld [vmem:[%s4 + $0xb8] sm:$0xff]
  %v614 = vld [vmem:[%s4 + $0xc0] sm:$0xff]
  %v615 = vld [vmem:[%s4 + $0xc8] sm:$0xff]
  %v616 = vld [vmem:[%s4 + $0xd0] sm:$0xff]
  %v617 = vld [vmem:[%s4 + $0xd8] sm:$0xff]
  %v618 = vld [vmem:[%s4 + $0xe0] sm:$0xff]
  %v619 = vld [vmem:[%s4 + $0xe8] sm:$0xff]
  %v620 = vld [vmem:[%s4 + $0xf0] sm:$0xff]
  %v621 = vld [vmem:[%s4 + $0xf8] sm:$0xff]
  %v622 = vld [vmem:[%s5] sm:$0x1]
  %v624 = vlaneseq
  %v625 = vshrl.u32 %v624, 7
  %v626 = vsub.s32 0, %v625
  %v627 = vrot.slane %v622, %v626
  %629 = vmatprep.subr.mxu0 0.0
  %630 = vmatpush1.msra.mxu0 %v590
  %631 = vmatprep.subr.mxu0 0.0
  %632 = vmatpush1.msra.mxu0 %v591
  %633 = vmatprep.subr.mxu0 0.0
  %634 = vmatpush1.msra.mxu0 %v592
  %635 = vmatprep.subr.mxu0 0.0
  %636 = vmatpush1.msra.mxu0 %v593
  %637 = vmatprep.subr.mxu0 0.0
  %638 = vmatpush1.msra.mxu0 %v594
  %639 = vmatprep.subr.mxu0 0.0
  %640 = vmatpush1.msra.mxu0 %v595
  %641 = vmatprep.subr.mxu0 0.0
  %642 = vmatpush1.msra.mxu0 %v596
  %643 = vmatprep.subr.mxu0 0.0
  %644 = vmatpush1.msra.mxu0 %v597
  %645 = vmatprep.subr.mxu0 0.0
  %646 = vmatpush1.msra.mxu0 %v598
  %647 = vmatprep.subr.mxu0 0.0
  %648 = vmatpush1.msra.mxu0 %v599
  %649 = vmatprep.subr.mxu0 0.0
  %650 = vmatpush1.msra.mxu0 %v600
  %651 = vmatprep.subr.mxu0 0.0
  %652 = vmatpush1.msra.mxu0 %v601
  %653 = vmatprep.subr.mxu0 0.0
  %654 = vmatpush1.msra.mxu0 %v602
  %655 = vmatprep.subr.mxu0 0.0
  %656 = vmatpush1.msra.mxu0 %v603
  %657 = vmatprep.subr.mxu0 0.0
  %658 = vmatpush1.msra.mxu0 %v604
  %659 = vmatprep.subr.mxu0 0.0
  %660 = vmatpush1.msra.mxu0 %v605
  %661 = vmatprep.subr.mxu0 0.0
  %662 = vmatpush1.msra.mxu0 %v606
  %663 = vmatprep.subr.mxu0 0.0
  %664 = vmatpush1.msra.mxu0 %v607
  %665 = vmatprep.subr.mxu0 0.0
  %666 = vmatpush1.msra.mxu0 %v608
  %667 = vmatprep.subr.mxu0 0.0
  %668 = vmatpush1.msra.mxu0 %v609
  %669 = vmatprep.subr.mxu0 0.0
  %670 = vmatpush1.msra.mxu0 %v610
  %671 = vmatprep.subr.mxu0 0.0
  %672 = vmatpush1.msra.mxu0 %v611
  %673 = vmatprep.subr.mxu0 0.0
  %674 = vmatpush1.msra.mxu0 %v612
  %675 = vmatprep.subr.mxu0 0.0
  %676 = vmatpush1.msra.mxu0 %v613
  %677 = vmatprep.subr.mxu0 0.0
  %678 = vmatpush1.msra.mxu0 %v614
  %679 = vmatprep.subr.mxu0 0.0
  %680 = vmatpush1.msra.mxu0 %v615
  %681 = vmatprep.subr.mxu0 0.0
  %682 = vmatpush1.msra.mxu0 %v616
  %683 = vmatprep.subr.mxu0 0.0
  %684 = vmatpush1.msra.mxu0 %v617
  %685 = vmatprep.subr.mxu0 0.0
  %686 = vmatpush1.msra.mxu0 %v618
  %687 = vmatprep.subr.mxu0 0.0
  %688 = vmatpush1.msra.mxu0 %v619
  %689 = vmatprep.subr.mxu0 0.0
  %690 = vmatpush1.msra.mxu0 %v620
  %691 = vmatprep.subr.mxu0 0.0
  %692 = vmatpush1.msra.mxu0 %v621
  %693 = vmatprep.mubr.f32.mxu0 %v589
  %694 = vmatmul.mubr.f32.gmra.mrb[0].mxu0 %v588
  %v695 = vpop.f32.mrb[0].mxu0
  %v696 = vadd.f32 %v627, %v695
  %v697 = vpop.f32.mrb[0].mxu0
  %698 = vdwg.mxu0
  %v699 = vmax.f32 %v696, 0.0
  %v700 = vld [vmem:[%s6] sm:$0xff]
  %v701 = vld [vmem:[%s6 + $0x8] sm:$0xff]
  %v702 = vld [vmem:[%s6 + $0x10] sm:$0xff]
  %v703 = vld [vmem:[%s6 + $0x18] sm:$0xff]
  %v704 = vld [vmem:[%s7] sm:$0x1]
  %v706 = vlaneseq
  %v707 = vshrl.u32 %v706, 7
  %v708 = vsub.s32 0, %v707
  %v709 = vrot.slane %v704, %v708
  %vm711 = vcmask 261120
  %v713 = vsel %vm711, %v699, 0
  %715 = vmatprep.subr.mxu0 0.0
  %716 = vmatpush1.msra.mxu0 %v700
  %717 = vmatprep.subr.mxu0 0.0
  %718 = vmatpush1.msra.mxu0 %v701
  %719 = vmatprep.subr.mxu0 0.0
  %720 = vmatpush1.msra.mxu0 %v702
  %721 = vmatprep.subr.mxu0 0.0
  %722 = vmatpush1.msra.mxu0 %v703
  %723 = vmatprep.subr.mxu0 0.0
  %724 = vmatpush1.msra.mxu0 0.0
  %725 = vmatprep.subr.mxu0 0.0
  %726 = vmatpush1.msra.mxu0 0.0
  %727 = vmatprep.subr.mxu0 0.0
  %728 = vmatpush1.msra.mxu0 0.0
  %729 = vmatprep.subr.mxu0 0.0
  %730 = vmatpush1.msra.mxu0 0.0
  %731 = vmatprep.subr.mxu0 0.0
  %732 = vmatpush1.msra.mxu0 0.0
  %733 = vmatprep.subr.mxu0 0.0
  %734 = vmatpush1.msra.mxu0 0.0
  %735 = vmatprep.subr.mxu0 0.0
  %736 = vmatpush1.msra.mxu0 0.0
  %737 = vmatprep.subr.mxu0 0.0
  %738 = vmatpush1.msra.mxu0 0.0
  %739 = vmatprep.subr.mxu0 0.0
  %740 = vmatpush1.msra.mxu0 0.0
  %741 = vmatprep.subr.mxu0 0.0
  %742 = vmatpush1.msra.mxu0 0.0
  %743 = vmatprep.subr.mxu0 0.0
  %744 = vmatpush1.msra.mxu0 0.0
  %745 = vmatprep.subr.mxu0 0.0
  %746 = vmatpush1.msra.mxu0 0.0
  %747 = vmatprep.subr.mxu0 0.0
  %748 = vmatpush1.msra.mxu0 0.0
  %749 = vmatprep.subr.mxu0 0.0
  %750 = vmatpush1.msra.mxu0 0.0
  %751 = vmatprep.subr.mxu0 0.0
  %752 = vmatpush1.msra.mxu0 0.0
  %753 = vmatprep.subr.mxu0 0.0
  %754 = vmatpush1.msra.mxu0 0.0
  %755 = vmatprep.subr.mxu0 0.0
  %756 = vmatpush1.msra.mxu0 0.0
  %757 = vmatprep.subr.mxu0 0.0
  %758 = vmatpush1.msra.mxu0 0.0
  %759 = vmatprep.subr.mxu0 0.0
  %760 = vmatpush1.msra.mxu0 0.0
  %761 = vmatprep.subr.mxu0 0.0
  %762 = vmatpush1.msra.mxu0 0.0
  %763 = vmatprep.subr.mxu0 0.0
  %764 = vmatpush1.msra.mxu0 0.0
  %765 = vmatprep.subr.mxu0 0.0
  %766 = vmatpush1.msra.mxu0 0.0
  %767 = vmatprep.subr.mxu0 0.0
  %768 = vmatpush1.msra.mxu0 0.0
  %769 = vmatprep.subr.mxu0 0.0
  %770 = vmatpush1.msra.mxu0 0.0
  %771 = vmatprep.subr.mxu0 0.0
  %772 = vmatpush1.msra.mxu0 0.0
  %773 = vmatprep.subr.mxu0 0.0
  %774 = vmatpush1.msra.mxu0 0.0
  %775 = vmatprep.subr.mxu0 0.0
  %776 = vmatpush1.msra.mxu0 0.0
  %777 = vmatprep.subr.mxu0 0.0
  %778 = vmatpush1.msra.mxu0 0.0
  %779 = vmatprep.mubr.f32.mxu0 0.0
  %780 = vmatmul.mubr.f32.gmra.mrb[0].mxu0 %v713
  %v781 = vpop.f32.mrb[0].mxu0
  %v782 = vadd.f32 %v709, %v781
  %v783 = vpop.f32.mrb[0].mxu0
  %784 = vdwg.mxu0
  %vm785 = vcmask 1024
  %786 = vst.msk [vmem:[%s15] sm:$0x3] %vm785, %v782
  %788 = vrot.lane.b32.xlu0 %v782, 127
  %v789 = vpop.permute.xlu0 %788
  %791 = vst.msk [vmem:[%s16] sm:$0x3] %vm785, %v789
  %v792 = vld [vmem:[%s1] sm:$0x3]
  %v793 = vmul.f32 %v782, 0.5
  %v794 = vmul.f32 %v793, 1.442695
  %v795 = vpow.pop %v794
  %797 = vrot.lane.b32.xlu0 %v795, 127
  %v798 = vpop.permute.xlu0 %797
  %v800 = vmul.f32 %v792, %v798
  %v801 = vadd.f32 %v782, %v800
  %v802 = vld [vmem:[%s8] sm:$0x1]
  %804 = vset.pattern.permute.xlu0 0
  %805 = vperm.xlu0 %804, %v801
  %v806 = vpop.permute.xlu0 %805
  %v809 = vlaneseq
  %v810 = vshrl.u32 %v809, 7
  %v811 = vsub.s32 0, %v810
  %v812 = vrot.slane %v802, %v811
  %v814 = vmul.f32 %v806, %v812
  %v815 = vld [vmem:[%s9] sm:$0x1]
  %v817 = vlaneseq
  %v818 = vshrl.u32 %v817, 7
  %v819 = vsub.s32 0, %v818
  %v820 = vrot.slane %v815, %v819
  %v822 = vadd.f32 %v814, %v820
  %v823 = vmax.f32 %v822, 0.0
  %v824 = vld [vmem:[%s10] sm:$0xff]
  %v825 = vld [vmem:[%s10 + $0x8] sm:$0xff]
  %v826 = vld [vmem:[%s10 + $0x10] sm:$0xff]
  %v827 = vld [vmem:[%s10 + $0x18] sm:$0xff]
  %v828 = vld [vmem:[%s10 + $0x20] sm:$0xff]
  %v829 = vld [vmem:[%s10 + $0x28] sm:$0xff]
  %v830 = vld [vmem:[%s10 + $0x30] sm:$0xff]
  %v831 = vld [vmem:[%s10 + $0x38] sm:$0xff]
  %v832 = vld [vmem:[%s11] sm:$0x3]
  %v834 = vlaneseq
  %v835 = vshrl.u32 %v834, 7
  %v836 = vsub.s32 0, %v835
  %v837 = vrot.slane %v832, %v836
  %v838 = vlaneseq
  %v839 = vshrl.u32 %v838, 7
  %v840 = vsub.s32 1, %v839
  %v841 = vrot.slane %v832, %v840
  %v845 = vsel %vm711, %v823, 0
  %847 = vmatprep.subr.mxu0 %v825
  %848 = vmatpush1.msra.mxu0 %v824
  %849 = vmatprep.subr.mxu0 %v827
  %850 = vmatpush1.msra.mxu0 %v826
  %851 = vmatprep.subr.mxu0 %v829
  %852 = vmatpush1.msra.mxu0 %v828
  %853 = vmatprep.subr.mxu0 %v831
  %854 = vmatpush1.msra.mxu0 %v830
  %855 = vmatprep.subr.mxu0 0.0
  %856 = vmatpush1.msra.mxu0 0.0
  %857 = vmatprep.subr.mxu0 0.0
  %858 = vmatpush1.msra.mxu0 0.0
  %859 = vmatprep.subr.mxu0 0.0
  %860 = vmatpush1.msra.mxu0 0.0
  %861 = vmatprep.subr.mxu0 0.0
  %862 = vmatpush1.msra.mxu0 0.0
  %863 = vmatprep.subr.mxu0 0.0
  %864 = vmatpush1.msra.mxu0 0.0
  %865 = vmatprep.subr.mxu0 0.0
  %866 = vmatpush1.msra.mxu0 0.0
  %867 = vmatprep.subr.mxu0 0.0
  %868 = vmatpush1.msra.mxu0 0.0
  %869 = vmatprep.subr.mxu0 0.0
  %870 = vmatpush1.msra.mxu0 0.0
  %871 = vmatprep.subr.mxu0 0.0
  %872 = vmatpush1.msra.mxu0 0.0
  %873 = vmatprep.subr.mxu0 0.0
  %874 = vmatpush1.msra.mxu0 0.0
  %875 = vmatprep.subr.mxu0 0.0
  %876 = vmatpush1.msra.mxu0 0.0
  %877 = vmatprep.subr.mxu0 0.0
  %878 = vmatpush1.msra.mxu0 0.0
  %879 = vmatprep.subr.mxu0 0.0
  %880 = vmatpush1.msra.mxu0 0.0
  %881 = vmatprep.subr.mxu0 0.0
  %882 = vmatpush1.msra.mxu0 0.0
  %883 = vmatprep.subr.mxu0 0.0
  %884 = vmatpush1.msra.mxu0 0.0
  %885 = vmatprep.subr.mxu0 0.0
  %886 = vmatpush1.msra.mxu0 0.0
  %887 = vmatprep.subr.mxu0 0.0
  %888 = vmatpush1.msra.mxu0 0.0
  %889 = vmatprep.subr.mxu0 0.0
  %890 = vmatpush1.msra.mxu0 0.0
  %891 = vmatprep.subr.mxu0 0.0
  %892 = vmatpush1.msra.mxu0 0.0
  %893 = vmatprep.subr.mxu0 0.0
  %894 = vmatpush1.msra.mxu0 0.0
  %895 = vmatprep.subr.mxu0 0.0
  %896 = vmatpush1.msra.mxu0 0.0
  %897 = vmatprep.subr.mxu0 0.0
  %898 = vmatpush1.msra.mxu0 0.0
  %899 = vmatprep.subr.mxu0 0.0
  %900 = vmatpush1.msra.mxu0 0.0
  %901 = vmatprep.subr.mxu0 0.0
  %902 = vmatpush1.msra.mxu0 0.0
  %903 = vmatprep.subr.mxu0 0.0
  %904 = vmatpush1.msra.mxu0 0.0
  %905 = vmatprep.subr.mxu0 0.0
  %906 = vmatpush1.msra.mxu0 0.0
  %907 = vmatprep.subr.mxu0 0.0
  %908 = vmatpush1.msra.mxu0 0.0
  %909 = vmatprep.subr.mxu0 0.0
  %910 = vmatpush1.msra.mxu0 0.0
  %911 = vmatprep.mubr.f32.mxu0 0.0
  %912 = vmatmul.mubr.f32.gmra.mrb[0].mxu0 %v845
  %v913 = vpop.f32.mrb[0].mxu0
  %v914 = vadd.f32 %v837, %v913
  %v915 = vpop.f32.mrb[0].mxu0
  %v916 = vadd.f32 %v841, %v915
  %917 = vdwg.mxu0
  %v918 = vmax.f32 %v914, 0.0
  %v919 = vmax.f32 %v916, 0.0
  %v920 = vld [vmem:[%s12] sm:$0xff]
  %v921 = vld [vmem:[%s12 + $0x8] sm:$0xff]
  %v922 = vld [vmem:[%s12 + $0x10] sm:$0xff]
  %v923 = vld [vmem:[%s12 + $0x18] sm:$0xff]
  %v924 = vld [vmem:[%s12 + $0x20] sm:$0xff]
  %v925 = vld [vmem:[%s12 + $0x28] sm:$0xff]
  %v926 = vld [vmem:[%s12 + $0x30] sm:$0xff]
  %v927 = vld [vmem:[%s12 + $0x38] sm:$0xff]
  %v928 = vld [vmem:[%s12 + $0x40] sm:$0xff]
  %v929 = vld [vmem:[%s12 + $0x48] sm:$0xff]
  %v930 = vld [vmem:[%s12 + $0x50] sm:$0xff]
  %v931 = vld [vmem:[%s12 + $0x58] sm:$0xff]
  %v932 = vld [vmem:[%s12 + $0x60] sm:$0xff]
  %v933 = vld [vmem:[%s12 + $0x68] sm:$0xff]
  %v934 = vld [vmem:[%s12 + $0x70] sm:$0xff]
  %v935 = vld [vmem:[%s12 + $0x78] sm:$0xff]
  %v936 = vld [vmem:[%s12 + $0x80] sm:$0xff]
  %v937 = vld [vmem:[%s12 + $0x88] sm:$0xff]
  %v938 = vld [vmem:[%s12 + $0x90] sm:$0xff]
  %v939 = vld [vmem:[%s12 + $0x98] sm:$0xff]
  %v940 = vld [vmem:[%s12 + $0xa0] sm:$0xff]
  %v941 = vld [vmem:[%s12 + $0xa8] sm:$0xff]
  %v942 = vld [vmem:[%s12 + $0xb0] sm:$0xff]
  %v943 = vld [vmem:[%s12 + $0xb8] sm:$0xff]
  %v944 = vld [vmem:[%s12 + $0xc0] sm:$0xff]
  %v945 = vld [vmem:[%s12 + $0xc8] sm:$0xff]
  %v946 = vld [vmem:[%s12 + $0xd0] sm:$0xff]
  %v947 = vld [vmem:[%s12 + $0xd8] sm:$0xff]
  %v948 = vld [vmem:[%s12 + $0xe0] sm:$0xff]
  %v949 = vld [vmem:[%s12 + $0xe8] sm:$0xff]
  %v950 = vld [vmem:[%s12 + $0xf0] sm:$0xff]
  %v951 = vld [vmem:[%s12 + $0xf8] sm:$0xff]
  %v952 = vld [vmem:[%s12 + $0x100] sm:$0xff]
  %v953 = vld [vmem:[%s12 + $0x108] sm:$0xff]
  %v954 = vld [vmem:[%s12 + $0x110] sm:$0xff]
  %v955 = vld [vmem:[%s12 + $0x118] sm:$0xff]
  %v956 = vld [vmem:[%s12 + $0x120] sm:$0xff]
  %v957 = vld [vmem:[%s12 + $0x128] sm:$0xff]
  %v958 = vld [vmem:[%s12 + $0x130] sm:$0xff]
  %v959 = vld [vmem:[%s12 + $0x138] sm:$0xff]
  %v960 = vld [vmem:[%s12 + $0x140] sm:$0xff]
  %v961 = vld [vmem:[%s12 + $0x148] sm:$0xff]
  %v962 = vld [vmem:[%s12 + $0x150] sm:$0xff]
  %v963 = vld [vmem:[%s12 + $0x158] sm:$0xff]
  %v964 = vld [vmem:[%s12 + $0x160] sm:$0xff]
  %v965 = vld [vmem:[%s12 + $0x168] sm:$0xff]
  %v966 = vld [vmem:[%s12 + $0x170] sm:$0xff]
  %v967 = vld [vmem:[%s12 + $0x178] sm:$0xff]
  %v968 = vld [vmem:[%s12 + $0x180] sm:$0xff]
  %v969 = vld [vmem:[%s12 + $0x188] sm:$0xff]
  %v970 = vld [vmem:[%s12 + $0x190] sm:$0xff]
  %v971 = vld [vmem:[%s12 + $0x198] sm:$0xff]
  %v972 = vld [vmem:[%s12 + $0x1a0] sm:$0xff]
  %v973 = vld [vmem:[%s12 + $0x1a8] sm:$0xff]
  %v974 = vld [vmem:[%s12 + $0x1b0] sm:$0xff]
  %v975 = vld [vmem:[%s12 + $0x1b8] sm:$0xff]
  %v976 = vld [vmem:[%s12 + $0x1c0] sm:$0xff]
  %v977 = vld [vmem:[%s12 + $0x1c8] sm:$0xff]
  %v978 = vld [vmem:[%s12 + $0x1d0] sm:$0xff]
  %v979 = vld [vmem:[%s12 + $0x1d8] sm:$0xff]
  %v980 = vld [vmem:[%s12 + $0x1e0] sm:$0xff]
  %v981 = vld [vmem:[%s12 + $0x1e8] sm:$0xff]
  %v982 = vld [vmem:[%s12 + $0x1f0] sm:$0xff]
  %v983 = vld [vmem:[%s12 + $0x1f8] sm:$0xff]
  %v984 = vld [vmem:[%s12 + $0x200] sm:$0xff]
  %v985 = vld [vmem:[%s12 + $0x208] sm:$0xff]
  %v986 = vld [vmem:[%s12 + $0x210] sm:$0xff]
  %v987 = vld [vmem:[%s12 + $0x218] sm:$0xff]
  %v988 = vld [vmem:[%s12 + $0x220] sm:$0xff]
  %v989 = vld [vmem:[%s12 + $0x228] sm:$0xff]
  %v990 = vld [vmem:[%s12 + $0x230] sm:$0xff]
  %v991 = vld [vmem:[%s12 + $0x238] sm:$0xff]
  %v992 = vld [vmem:[%s12 + $0x240] sm:$0xff]
  %v993 = vld [vmem:[%s12 + $0x248] sm:$0xff]
  %v994 = vld [vmem:[%s12 + $0x250] sm:$0xff]
  %v995 = vld [vmem:[%s12 + $0x258] sm:$0xff]
  %v996 = vld [vmem:[%s12 + $0x260] sm:$0xff]
  %v997 = vld [vmem:[%s12 + $0x268] sm:$0xff]
  %v998 = vld [vmem:[%s12 + $0x270] sm:$0xff]
  %v999 = vld [vmem:[%s12 + $0x278] sm:$0xff]
  %v1000 = vld [vmem:[%s12 + $0x280] sm:$0xff]
  %v1001 = vld [vmem:[%s12 + $0x288] sm:$0xff]
  %v1002 = vld [vmem:[%s12 + $0x290] sm:$0xff]
  %v1003 = vld [vmem:[%s12 + $0x298] sm:$0xff]
  %v1004 = vld [vmem:[%s12 + $0x2a0] sm:$0xff]
  %v1005 = vld [vmem:[%s12 + $0x2a8] sm:$0xff]
  %v1006 = vld [vmem:[%s12 + $0x2b0] sm:$0xff]
  %v1007 = vld [vmem:[%s12 + $0x2b8] sm:$0xff]
  %v1008 = vld [vmem:[%s12 + $0x2c0] sm:$0xff]
  %v1009 = vld [vmem:[%s12 + $0x2c8] sm:$0xff]
  %v1010 = vld [vmem:[%s12 + $0x2d0] sm:$0xff]
  %v1011 = vld [vmem:[%s12 + $0x2d8] sm:$0xff]
  %v1012 = vld [vmem:[%s12 + $0x2e0] sm:$0xff]
  %v1013 = vld [vmem:[%s12 + $0x2e8] sm:$0xff]
  %v1014 = vld [vmem:[%s12 + $0x2f0] sm:$0xff]
  %v1015 = vld [vmem:[%s12 + $0x2f8] sm:$0xff]
  %v1016 = vld [vmem:[%s12 + $0x300] sm:$0xff]
  %v1017 = vld [vmem:[%s12 + $0x308] sm:$0xff]
  %v1018 = vld [vmem:[%s12 + $0x310] sm:$0xff]
  %v1019 = vld [vmem:[%s12 + $0x318] sm:$0xff]
  %v1020 = vld [vmem:[%s12 + $0x320] sm:$0xff]
  %v1021 = vld [vmem:[%s12 + $0x328] sm:$0xff]
  %v1022 = vld [vmem:[%s12 + $0x330] sm:$0xff]
  %v1023 = vld [vmem:[%s12 + $0x338] sm:$0xff]
  %v1024 = vld [vmem:[%s12 + $0x340] sm:$0xff]
  %v1025 = vld [vmem:[%s12 + $0x348] sm:$0xff]
  %v1026 = vld [vmem:[%s12 + $0x350] sm:$0xff]
  %v1027 = vld [vmem:[%s12 + $0x358] sm:$0xff]
  %v1028 = vld [vmem:[%s12 + $0x360] sm:$0xff]
  %v1029 = vld [vmem:[%s12 + $0x368] sm:$0xff]
  %v1030 = vld [vmem:[%s12 + $0x370] sm:$0xff]
  %v1031 = vld [vmem:[%s12 + $0x378] sm:$0xff]
  %v1032 = vld [vmem:[%s12 + $0x380] sm:$0xff]
  %v1033 = vld [vmem:[%s12 + $0x388] sm:$0xff]
  %v1034 = vld [vmem:[%s12 + $0x390] sm:$0xff]
  %v1035 = vld [vmem:[%s12 + $0x398] sm:$0xff]
  %v1036 = vld [vmem:[%s12 + $0x3a0] sm:$0xff]
  %v1037 = vld [vmem:[%s12 + $0x3a8] sm:$0xff]
  %v1038 = vld [vmem:[%s12 + $0x3b0] sm:$0xff]
  %v1039 = vld [vmem:[%s12 + $0x3b8] sm:$0xff]
  %v1040 = vld [vmem:[%s12 + $0x3c0] sm:$0xff]
  %v1041 = vld [vmem:[%s12 + $0x3c8] sm:$0xff]
  %v1042 = vld [vmem:[%s12 + $0x3d0] sm:$0xff]
  %v1043 = vld [vmem:[%s12 + $0x3d8] sm:$0xff]
  %v1044 = vld [vmem:[%s12 + $0x3e0] sm:$0xff]
  %v1045 = vld [vmem:[%s12 + $0x3e8] sm:$0xff]
  %v1046 = vld [vmem:[%s12 + $0x3f0] sm:$0xff]
  %v1047 = vld [vmem:[%s12 + $0x3f8] sm:$0xff]
  %v1048 = vld [vmem:[%s12 + $0x400] sm:$0xff]
  %v1049 = vld [vmem:[%s12 + $0x408] sm:$0xff]
  %v1050 = vld [vmem:[%s12 + $0x410] sm:$0xff]
  %v1051 = vld [vmem:[%s12 + $0x418] sm:$0xff]
  %v1052 = vld [vmem:[%s12 + $0x420] sm:$0xff]
  %v1053 = vld [vmem:[%s12 + $0x428] sm:$0xff]
  %v1054 = vld [vmem:[%s12 + $0x430] sm:$0xff]
  %v1055 = vld [vmem:[%s12 + $0x438] sm:$0xff]
  %v1056 = vld [vmem:[%s12 + $0x440] sm:$0xff]
  %v1057 = vld [vmem:[%s12 + $0x448] sm:$0xff]
  %v1058 = vld [vmem:[%s12 + $0x450] sm:$0xff]
  %v1059 = vld [vmem:[%s12 + $0x458] sm:$0xff]
  %v1060 = vld [vmem:[%s12 + $0x460] sm:$0xff]
  %v1061 = vld [vmem:[%s12 + $0x468] sm:$0xff]
  %v1062 = vld [vmem:[%s12 + $0x470] sm:$0xff]
  %v1063 = vld [vmem:[%s12 + $0x478] sm:$0xff]
  %v1064 = vld [vmem:[%s12 + $0x480] sm:$0xff]
  %v1065 = vld [vmem:[%s12 + $0x488] sm:$0xff]
  %v1066 = vld [vmem:[%s12 + $0x490] sm:$0xff]
  %v1067 = vld [vmem:[%s12 + $0x498] sm:$0xff]
  %v1068 = vld [vmem:[%s12 + $0x4a0] sm:$0xff]
  %v1069 = vld [vmem:[%s12 + $0x4a8] sm:$0xff]
  %v1070 = vld [vmem:[%s12 + $0x4b0] sm:$0xff]
  %v1071 = vld [vmem:[%s12 + $0x4b8] sm:$0xff]
  %v1072 = vld [vmem:[%s12 + $0x4c0] sm:$0xff]
  %v1073 = vld [vmem:[%s12 + $0x4c8] sm:$0xff]
  %v1074 = vld [vmem:[%s12 + $0x4d0] sm:$0xff]
  %v1075 = vld [vmem:[%s12 + $0x4d8] sm:$0xff]
  %v1076 = vld [vmem:[%s12 + $0x4e0] sm:$0xff]
  %v1077 = vld [vmem:[%s12 + $0x4e8] sm:$0xff]
  %v1078 = vld [vmem:[%s12 + $0x4f0] sm:$0xff]
  %v1079 = vld [vmem:[%s12 + $0x4f8] sm:$0xff]
  %v1080 = vld [vmem:[%s12 + $0x500] sm:$0xff]
  %v1081 = vld [vmem:[%s12 + $0x508] sm:$0xff]
  %v1082 = vld [vmem:[%s12 + $0x510] sm:$0xff]
  %v1083 = vld [vmem:[%s12 + $0x518] sm:$0xff]
  %v1084 = vld [vmem:[%s12 + $0x520] sm:$0xff]
  %v1085 = vld [vmem:[%s12 + $0x528] sm:$0xff]
  %v1086 = vld [vmem:[%s12 + $0x530] sm:$0xff]
  %v1087 = vld [vmem:[%s12 + $0x538] sm:$0xff]
  %v1088 = vld [vmem:[%s12 + $0x540] sm:$0xff]
  %v1089 = vld [vmem:[%s12 + $0x548] sm:$0xff]
  %v1090 = vld [vmem:[%s12 + $0x550] sm:$0xff]
  %v1091 = vld [vmem:[%s12 + $0x558] sm:$0xff]
  %v1092 = vld [vmem:[%s12 + $0x560] sm:$0xff]
  %v1093 = vld [vmem:[%s12 + $0x568] sm:$0xff]
  %v1094 = vld [vmem:[%s12 + $0x570] sm:$0xff]
  %v1095 = vld [vmem:[%s12 + $0x578] sm:$0xff]
  %v1096 = vld [vmem:[%s12 + $0x580] sm:$0xff]
  %v1097 = vld [vmem:[%s12 + $0x588] sm:$0xff]
  %v1098 = vld [vmem:[%s12 + $0x590] sm:$0xff]
  %v1099 = vld [vmem:[%s12 + $0x598] sm:$0xff]
  %v1100 = vld [vmem:[%s12 + $0x5a0] sm:$0xff]
  %v1101 = vld [vmem:[%s12 + $0x5a8] sm:$0xff]
  %v1102 = vld [vmem:[%s12 + $0x5b0] sm:$0xff]
  %v1103 = vld [vmem:[%s12 + $0x5b8] sm:$0xff]
  %v1104 = vld [vmem:[%s12 + $0x5c0] sm:$0xff]
  %v1105 = vld [vmem:[%s12 + $0x5c8] sm:$0xff]
  %v1106 = vld [vmem:[%s12 + $0x5d0] sm:$0xff]
  %v1107 = vld [vmem:[%s12 + $0x5d8] sm:$0xff]
  %v1108 = vld [vmem:[%s12 + $0x5e0] sm:$0xff]
  %v1109 = vld [vmem:[%s12 + $0x5e8] sm:$0xff]
  %v1110 = vld [vmem:[%s12 + $0x5f0] sm:$0xff]
  %v1111 = vld [vmem:[%s12 + $0x5f8] sm:$0xff]
  %v1112 = vld [vmem:[%s12 + $0x600] sm:$0xff]
  %v1113 = vld [vmem:[%s12 + $0x608] sm:$0xff]
  %v1114 = vld [vmem:[%s12 + $0x610] sm:$0xff]
  %v1115 = vld [vmem:[%s12 + $0x618] sm:$0xff]
  %v1116 = vld [vmem:[%s12 + $0x620] sm:$0xff]
  %v1117 = vld [vmem:[%s12 + $0x628] sm:$0xff]
  %v1118 = vld [vmem:[%s12 + $0x630] sm:$0xff]
  %v1119 = vld [vmem:[%s12 + $0x638] sm:$0xff]
  %v1120 = vld [vmem:[%s12 + $0x640] sm:$0xff]
  %v1121 = vld [vmem:[%s12 + $0x648] sm:$0xff]
  %v1122 = vld [vmem:[%s12 + $0x650] sm:$0xff]
  %v1123 = vld [vmem:[%s12 + $0x658] sm:$0xff]
  %v1124 = vld [vmem:[%s12 + $0x660] sm:$0xff]
  %v1125 = vld [vmem:[%s12 + $0x668] sm:$0xff]
  %v1126 = vld [vmem:[%s12 + $0x670] sm:$0xff]
  %v1127 = vld [vmem:[%s12 + $0x678] sm:$0xff]
  %v1128 = vld [vmem:[%s12 + $0x680] sm:$0xff]
  %v1129 = vld [vmem:[%s12 + $0x688] sm:$0xff]
  %v1130 = vld [vmem:[%s12 + $0x690] sm:$0xff]
  %v1131 = vld [vmem:[%s12 + $0x698] sm:$0xff]
  %v1132 = vld [vmem:[%s12 + $0x6a0] sm:$0xff]
  %v1133 = vld [vmem:[%s12 + $0x6a8] sm:$0xff]
  %v1134 = vld [vmem:[%s12 + $0x6b0] sm:$0xff]
  %v1135 = vld [vmem:[%s12 + $0x6b8] sm:$0xff]
  %v1136 = vld [vmem:[%s12 + $0x6c0] sm:$0xff]
  %v1137 = vld [vmem:[%s12 + $0x6c8] sm:$0xff]
  %v1138 = vld [vmem:[%s12 + $0x6d0] sm:$0xff]
  %v1139 = vld [vmem:[%s12 + $0x6d8] sm:$0xff]
  %v1140 = vld [vmem:[%s12 + $0x6e0] sm:$0xff]
  %v1141 = vld [vmem:[%s12 + $0x6e8] sm:$0xff]
  %v1142 = vld [vmem:[%s12 + $0x6f0] sm:$0xff]
  %v1143 = vld [vmem:[%s12 + $0x6f8] sm:$0xff]
  %v1144 = vld [vmem:[%s13] sm:$0x7f]
  %v1146 = vlaneseq
  %v1147 = vshrl.u32 %v1146, 7
  %v1148 = vsub.s32 0, %v1147
  %v1149 = vrot.slane %v1144, %v1148
  %v1150 = vlaneseq
  %v1151 = vshrl.u32 %v1150, 7
  %v1152 = vsub.s32 1, %v1151
  %v1153 = vrot.slane %v1144, %v1152
  %v1154 = vlaneseq
  %v1155 = vshrl.u32 %v1154, 7
  %v1156 = vsub.s32 2, %v1155
  %v1157 = vrot.slane %v1144, %v1156
  %v1158 = vlaneseq
  %v1159 = vshrl.u32 %v1158, 7
  %v1160 = vsub.s32 3, %v1159
  %v1161 = vrot.slane %v1144, %v1160
  %v1162 = vlaneseq
  %v1163 = vshrl.u32 %v1162, 7
  %v1164 = vsub.s32 4, %v1163
  %v1165 = vrot.slane %v1144, %v1164
  %v1166 = vlaneseq
  %v1167 = vshrl.u32 %v1166, 7
  %v1168 = vsub.s32 5, %v1167
  %v1169 = vrot.slane %v1144, %v1168
  %v1170 = vlaneseq
  %v1171 = vshrl.u32 %v1170, 7
  %v1172 = vsub.s32 6, %v1171
  %v1173 = vrot.slane %v1144, %v1172
  %1181 = vmatprep.subr.mxu0 %v921
  %1182 = vmatpush1.msra.mxu0 %v920
  %1183 = vmatprep.subr.mxu0 %v928
  %1184 = vmatpush1.msra.mxu0 %v927
  %1185 = vmatprep.subr.mxu0 %v935
  %1186 = vmatpush1.msra.mxu0 %v934
  %1187 = vmatprep.subr.mxu0 %v942
  %1188 = vmatpush1.msra.mxu0 %v941
  %1189 = vmatprep.subr.mxu0 %v949
  %1190 = vmatpush1.msra.mxu0 %v948
  %1191 = vmatprep.subr.mxu0 %v956
  %1192 = vmatpush1.msra.mxu0 %v955
  %1193 = vmatprep.subr.mxu0 %v963
  %1194 = vmatpush1.msra.mxu0 %v962
  %1195 = vmatprep.subr.mxu0 %v970
  %1196 = vmatpush1.msra.mxu0 %v969
  %1197 = vmatprep.subr.mxu0 %v977
  %1198 = vmatpush1.msra.mxu0 %v976
  %1199 = vmatprep.subr.mxu0 %v984
  %1200 = vmatpush1.msra.mxu0 %v983
  %1201 = vmatprep.subr.mxu0 %v991
  %1202 = vmatpush1.msra.mxu0 %v990
  %1203 = vmatprep.subr.mxu0 %v998
  %1204 = vmatpush1.msra.mxu0 %v997
  %1205 = vmatprep.subr.mxu0 %v1005
  %1206 = vmatpush1.msra.mxu0 %v1004
  %1207 = vmatprep.subr.mxu0 %v1012
  %1208 = vmatpush1.msra.mxu0 %v1011
  %1209 = vmatprep.subr.mxu0 %v1019
  %1210 = vmatpush1.msra.mxu0 %v1018
  %1211 = vmatprep.subr.mxu0 %v1026
  %1212 = vmatpush1.msra.mxu0 %v1025
  %1213 = vmatprep.subr.mxu0 %v1033
  %1214 = vmatpush1.msra.mxu0 %v1032
  %1215 = vmatprep.subr.mxu0 %v1040
  %1216 = vmatpush1.msra.mxu0 %v1039
  %1217 = vmatprep.subr.mxu0 %v1047
  %1218 = vmatpush1.msra.mxu0 %v1046
  %1219 = vmatprep.subr.mxu0 %v1054
  %1220 = vmatpush1.msra.mxu0 %v1053
  %1221 = vmatprep.subr.mxu0 %v1061
  %1222 = vmatpush1.msra.mxu0 %v1060
  %1223 = vmatprep.subr.mxu0 %v1068
  %1224 = vmatpush1.msra.mxu0 %v1067
  %1225 = vmatprep.subr.mxu0 %v1075
  %1226 = vmatpush1.msra.mxu0 %v1074
  %1227 = vmatprep.subr.mxu0 %v1082
  %1228 = vmatpush1.msra.mxu0 %v1081
  %1229 = vmatprep.subr.mxu0 %v1089
  %1230 = vmatpush1.msra.mxu0 %v1088
  %1231 = vmatprep.subr.mxu0 %v1096
  %1232 = vmatpush1.msra.mxu0 %v1095
  %1233 = vmatprep.subr.mxu0 %v1103
  %1234 = vmatpush1.msra.mxu0 %v1102
  %1235 = vmatprep.subr.mxu0 %v1110
  %1236 = vmatpush1.msra.mxu0 %v1109
  %1237 = vmatprep.subr.mxu0 %v1117
  %1238 = vmatpush1.msra.mxu0 %v1116
  %1239 = vmatprep.subr.mxu0 %v1124
  %1240 = vmatpush1.msra.mxu0 %v1123
  %1241 = vmatprep.subr.mxu0 %v1131
  %1242 = vmatpush1.msra.mxu0 %v1130
  %1243 = vmatprep.subr.mxu0 %v1138
  %1244 = vmatpush1.msra.mxu0 %v1137
  %1245 = vmatprep.mubr.f32.mxu0 %v919
  %1246 = vmatmul.mubr.f32.gmra.mrb[0].mxu0 %v918
  %v1247 = vpop.f32.mrb[0].mxu0
  %v1248 = vadd.f32 %v1149, %v1247
  %v1249 = vpop.f32.mrb[0].mxu0
  %v1250 = vadd.f32 %v1153, %v1249
  %1251 = vdwg.mxu0
  %1252 = vmatprep.subr.mxu0 %v923
  %1253 = vmatpush1.msra.mxu0 %v922
  %1254 = vmatprep.subr.mxu0 %v930
  %1255 = vmatpush1.msra.mxu0 %v929
  %1256 = vmatprep.subr.mxu0 %v937
  %1257 = vmatpush1.msra.mxu0 %v936
  %1258 = vmatprep.subr.mxu0 %v944
  %1259 = vmatpush1.msra.mxu0 %v943
  %1260 = vmatprep.subr.mxu0 %v951
  %1261 = vmatpush1.msra.mxu0 %v950
  %1262 = vmatprep.subr.mxu0 %v958
  %1263 = vmatpush1.msra.mxu0 %v957
  %1264 = vmatprep.subr.mxu0 %v965
  %1265 = vmatpush1.msra.mxu0 %v964
  %1266 = vmatprep.subr.mxu0 %v972
  %1267 = vmatpush1.msra.mxu0 %v971
  %1268 = vmatprep.subr.mxu0 %v979
  %1269 = vmatpush1.msra.mxu0 %v978
  %1270 = vmatprep.subr.mxu0 %v986
  %1271 = vmatpush1.msra.mxu0 %v985
  %1272 = vmatprep.subr.mxu0 %v993
  %1273 = vmatpush1.msra.mxu0 %v992
  %1274 = vmatprep.subr.mxu0 %v1000
  %1275 = vmatpush1.msra.mxu0 %v999
  %1276 = vmatprep.subr.mxu0 %v1007
  %1277 = vmatpush1.msra.mxu0 %v1006
  %1278 = vmatprep.subr.mxu0 %v1014
  %1279 = vmatpush1.msra.mxu0 %v1013
  %1280 = vmatprep.subr.mxu0 %v1021
  %1281 = vmatpush1.msra.mxu0 %v1020
  %1282 = vmatprep.subr.mxu0 %v1028
  %1283 = vmatpush1.msra.mxu0 %v1027
  %1284 = vmatprep.subr.mxu0 %v1035
  %1285 = vmatpush1.msra.mxu0 %v1034
  %1286 = vmatprep.subr.mxu0 %v1042
  %1287 = vmatpush1.msra.mxu0 %v1041
  %1288 = vmatprep.subr.mxu0 %v1049
  %1289 = vmatpush1.msra.mxu0 %v1048
  %1290 = vmatprep.subr.mxu0 %v1056
  %1291 = vmatpush1.msra.mxu0 %v1055
  %1292 = vmatprep.subr.mxu0 %v1063
  %1293 = vmatpush1.msra.mxu0 %v1062
  %1294 = vmatprep.subr.mxu0 %v1070
  %1295 = vmatpush1.msra.mxu0 %v1069
  %1296 = vmatprep.subr.mxu0 %v1077
  %1297 = vmatpush1.msra.mxu0 %v1076
  %1298 = vmatprep.subr.mxu0 %v1084
  %1299 = vmatpush1.msra.mxu0 %v1083
  %1300 = vmatprep.subr.mxu0 %v1091
  %1301 = vmatpush1.msra.mxu0 %v1090
  %1302 = vmatprep.subr.mxu0 %v1098
  %1303 = vmatpush1.msra.mxu0 %v1097
  %1304 = vmatprep.subr.mxu0 %v1105
  %1305 = vmatpush1.msra.mxu0 %v1104
  %1306 = vmatprep.subr.mxu0 %v1112
  %1307 = vmatpush1.msra.mxu0 %v1111
  %1308 = vmatprep.subr.mxu0 %v1119
  %1309 = vmatpush1.msra.mxu0 %v1118
  %1310 = vmatprep.subr.mxu0 %v1126
  %1311 = vmatpush1.msra.mxu0 %v1125
  %1312 = vmatprep.subr.mxu0 %v1133
  %1313 = vmatpush1.msra.mxu0 %v1132
  %1314 = vmatprep.subr.mxu0 %v1140
  %1315 = vmatpush1.msra.mxu0 %v1139
  %1316 = vmatprep.mubr.f32.mxu0 %v919
  %1317 = vmatmul.mubr.f32.gmra.mrb[0].mxu0 %v918
  %v1318 = vpop.f32.mrb[0].mxu0
  %v1319 = vadd.f32 %v1157, %v1318
  %v1320 = vpop.f32.mrb[0].mxu0
  %v1321 = vadd.f32 %v1161, %v1320
  %1322 = vdwg.mxu0
  %1323 = vmatprep.subr.mxu0 %v925
  %1324 = vmatpush1.msra.mxu0 %v924
  %1325 = vmatprep.subr.mxu0 %v932
  %1326 = vmatpush1.msra.mxu0 %v931
  %1327 = vmatprep.subr.mxu0 %v939
  %1328 = vmatpush1.msra.mxu0 %v938
  %1329 = vmatprep.subr.mxu0 %v946
  %1330 = vmatpush1.msra.mxu0 %v945
  %1331 = vmatprep.subr.mxu0 %v953
  %1332 = vmatpush1.msra.mxu0 %v952
  %1333 = vmatprep.subr.mxu0 %v960
  %1334 = vmatpush1.msra.mxu0 %v959
  %1335 = vmatprep.subr.mxu0 %v967
  %1336 = vmatpush1.msra.mxu0 %v966
  %1337 = vmatprep.subr.mxu0 %v974
  %1338 = vmatpush1.msra.mxu0 %v973
  %1339 = vmatprep.subr.mxu0 %v981
  %1340 = vmatpush1.msra.mxu0 %v980
  %1341 = vmatprep.subr.mxu0 %v988
  %1342 = vmatpush1.msra.mxu0 %v987
  %1343 = vmatprep.subr.mxu0 %v995
  %1344 = vmatpush1.msra.mxu0 %v994
  %1345 = vmatprep.subr.mxu0 %v1002
  %1346 = vmatpush1.msra.mxu0 %v1001
  %1347 = vmatprep.subr.mxu0 %v1009
  %1348 = vmatpush1.msra.mxu0 %v1008
  %1349 = vmatprep.subr.mxu0 %v1016
  %1350 = vmatpush1.msra.mxu0 %v1015
  %1351 = vmatprep.subr.mxu0 %v1023
  %1352 = vmatpush1.msra.mxu0 %v1022
  %1353 = vmatprep.subr.mxu0 %v1030
  %1354 = vmatpush1.msra.mxu0 %v1029
  %1355 = vmatprep.subr.mxu0 %v1037
  %1356 = vmatpush1.msra.mxu0 %v1036
  %1357 = vmatprep.subr.mxu0 %v1044
  %1358 = vmatpush1.msra.mxu0 %v1043
  %1359 = vmatprep.subr.mxu0 %v1051
  %1360 = vmatpush1.msra.mxu0 %v1050
  %1361 = vmatprep.subr.mxu0 %v1058
  %1362 = vmatpush1.msra.mxu0 %v1057
  %1363 = vmatprep.subr.mxu0 %v1065
  %1364 = vmatpush1.msra.mxu0 %v1064
  %1365 = vmatprep.subr.mxu0 %v1072
  %1366 = vmatpush1.msra.mxu0 %v1071
  %1367 = vmatprep.subr.mxu0 %v1079
  %1368 = vmatpush1.msra.mxu0 %v1078
  %1369 = vmatprep.subr.mxu0 %v1086
  %1370 = vmatpush1.msra.mxu0 %v1085
  %1371 = vmatprep.subr.mxu0 %v1093
  %1372 = vmatpush1.msra.mxu0 %v1092
  %1373 = vmatprep.subr.mxu0 %v1100
  %1374 = vmatpush1.msra.mxu0 %v1099
  %1375 = vmatprep.subr.mxu0 %v1107
  %1376 = vmatpush1.msra.mxu0 %v1106
  %1377 = vmatprep.subr.mxu0 %v1114
  %1378 = vmatpush1.msra.mxu0 %v1113
  %1379 = vmatprep.subr.mxu0 %v1121
  %1380 = vmatpush1.msra.mxu0 %v1120
  %1381 = vmatprep.subr.mxu0 %v1128
  %1382 = vmatpush1.msra.mxu0 %v1127
  %1383 = vmatprep.subr.mxu0 %v1135
  %1384 = vmatpush1.msra.mxu0 %v1134
  %1385 = vmatprep.subr.mxu0 %v1142
  %1386 = vmatpush1.msra.mxu0 %v1141
  %1387 = vmatprep.mubr.f32.mxu0 %v919
  %1388 = vmatmul.mubr.f32.gmra.mrb[0].mxu0 %v918
  %v1389 = vpop.f32.mrb[0].mxu0
  %v1390 = vadd.f32 %v1165, %v1389
  %v1391 = vpop.f32.mrb[0].mxu0
  %v1392 = vadd.f32 %v1169, %v1391
  %1393 = vdwg.mxu0
  %1394 = vmatprep.subr.mxu0 0.0
  %1395 = vmatpush1.msra.mxu0 %v926
  %1396 = vmatprep.subr.mxu0 0.0
  %1397 = vmatpush1.msra.mxu0 %v933
  %1398 = vmatprep.subr.mxu0 0.0
  %1399 = vmatpush1.msra.mxu0 %v940
  %1400 = vmatprep.subr.mxu0 0.0
  %1401 = vmatpush1.msra.mxu0 %v947
  %1402 = vmatprep.subr.mxu0 0.0
  %1403 = vmatpush1.msra.mxu0 %v954
  %1404 = vmatprep.subr.mxu0 0.0
  %1405 = vmatpush1.msra.mxu0 %v961
  %1406 = vmatprep.subr.mxu0 0.0
  %1407 = vmatpush1.msra.mxu0 %v968
  %1408 = vmatprep.subr.mxu0 0.0
  %1409 = vmatpush1.msra.mxu0 %v975
  %1410 = vmatprep.subr.mxu0 0.0
  %1411 = vmatpush1.msra.mxu0 %v982
  %1412 = vmatprep.subr.mxu0 0.0
  %1413 = vmatpush1.msra.mxu0 %v989
  %1414 = vmatprep.subr.mxu0 0.0
  %1415 = vmatpush1.msra.mxu0 %v996
  %1416 = vmatprep.subr.mxu0 0.0
  %1417 = vmatpush1.msra.mxu0 %v1003
  %1418 = vmatprep.subr.mxu0 0.0
  %1419 = vmatpush1.msra.mxu0 %v1010
  %1420 = vmatprep.subr.mxu0 0.0
  %1421 = vmatpush1.msra.mxu0 %v1017
  %1422 = vmatprep.subr.mxu0 0.0
  %1423 = vmatpush1.msra.mxu0 %v1024
  %1424 = vmatprep.subr.mxu0 0.0
  %1425 = vmatpush1.msra.mxu0 %v1031
  %1426 = vmatprep.subr.mxu0 0.0
  %1427 = vmatpush1.msra.mxu0 %v1038
  %1428 = vmatprep.subr.mxu0 0.0
  %1429 = vmatpush1.msra.mxu0 %v1045
  %1430 = vmatprep.subr.mxu0 0.0
  %1431 = vmatpush1.msra.mxu0 %v1052
  %1432 = vmatprep.subr.mxu0 0.0
  %1433 = vmatpush1.msra.mxu0 %v1059
  %1434 = vmatprep.subr.mxu0 0.0
  %1435 = vmatpush1.msra.mxu0 %v1066
  %1436 = vmatprep.subr.mxu0 0.0
  %1437 = vmatpush1.msra.mxu0 %v1073
  %1438 = vmatprep.subr.mxu0 0.0
  %1439 = vmatpush1.msra.mxu0 %v1080
  %1440 = vmatprep.subr.mxu0 0.0
  %1441 = vmatpush1.msra.mxu0 %v1087
  %1442 = vmatprep.subr.mxu0 0.0
  %1443 = vmatpush1.msra.mxu0 %v1094
  %1444 = vmatprep.subr.mxu0 0.0
  %1445 = vmatpush1.msra.mxu0 %v1101
  %1446 = vmatprep.subr.mxu0 0.0
  %1447 = vmatpush1.msra.mxu0 %v1108
  %1448 = vmatprep.subr.mxu0 0.0
  %1449 = vmatpush1.msra.mxu0 %v1115
  %1450 = vmatprep.subr.mxu0 0.0
  %1451 = vmatpush1.msra.mxu0 %v1122
  %1452 = vmatprep.subr.mxu0 0.0
  %1453 = vmatpush1.msra.mxu0 %v1129
  %1454 = vmatprep.subr.mxu0 0.0
  %1455 = vmatpush1.msra.mxu0 %v1136
  %1456 = vmatprep.subr.mxu0 0.0
  %1457 = vmatpush1.msra.mxu0 %v1143
  %1458 = vmatprep.mubr.f32.mxu0 %v919
  %1459 = vmatmul.mubr.f32.gmra.mrb[0].mxu0 %v918
  %v1460 = vpop.f32.mrb[0].mxu0
  %v1461 = vadd.f32 %v1173, %v1460
  %v1462 = vpop.f32.mrb[0].mxu0
  %1463 = vdwg.mxu0
  %v1464 = vxor.u32 %v1248, 2147483648
  %v1465 = vxor.u32 %v1250, 2147483648
  %v1466 = vxor.u32 %v1319, 2147483648
  %v1467 = vxor.u32 %v1321, 2147483648
  %v1468 = vxor.u32 %v1390, 2147483648
  %v1469 = vxor.u32 %v1392, 2147483648
  %v1470 = vxor.u32 %v1461, 2147483648
  %v1471 = vmul.f32 %v1464, 1.442695
  %v1472 = vpow.pop %v1471
  %v1473 = vmul.f32 %v1465, 1.442695
  %v1474 = vpow.pop %v1473
  %v1475 = vmul.f32 %v1466, 1.442695
  %v1476 = vpow.pop %v1475
  %v1477 = vmul.f32 %v1467, 1.442695
  %v1478 = vpow.pop %v1477
  %v1479 = vmul.f32 %v1468, 1.442695
  %v1480 = vpow.pop %v1479
  %v1481 = vmul.f32 %v1469, 1.442695
  %v1482 = vpow.pop %v1481
  %v1483 = vmul.f32 %v1470, 1.442695
  %v1484 = vpow.pop %v1483
  %v1485 = vadd.f32 %v1472, 1.0
  %v1486 = vadd.f32 %v1474, 1.0
  %v1487 = vadd.f32 %v1476, 1.0
  %v1488 = vadd.f32 %v1478, 1.0
  %v1489 = vadd.f32 %v1480, 1.0
  %v1490 = vadd.f32 %v1482, 1.0
  %v1491 = vadd.f32 %v1484, 1.0
  %v1492 = vrcp.pop %v1485
  %v1493 = vmul.f32 1.0, %v1492
  %v1494 = vrcp.pop %v1486
  %v1495 = vmul.f32 1.0, %v1494
  %v1496 = vrcp.pop %v1487
  %v1497 = vmul.f32 1.0, %v1496
  %v1498 = vrcp.pop %v1488
  %v1499 = vmul.f32 1.0, %v1498
  %v1500 = vrcp.pop %v1489
  %v1501 = vmul.f32 1.0, %v1500
  %v1502 = vrcp.pop %v1490
  %v1503 = vmul.f32 1.0, %v1502
  %v1504 = vrcp.pop %v1491
  %v1505 = vmul.f32 1.0, %v1504
  %v1513 = vcombine.low %v1493, %v1495
  %v1514 = vcombine.low %v1497, %v1499
  %v1516 = vunpack.c.l.s4 1983009808
  %v1517 = vunpack.c.0.s8 %v1516
  %v1518 = vlaneseq
  %v1519 = vshrl.u32 %v1518, 7
  %v1520 = vsub.s32 %v1517, %v1519
  %v1521 = vrot.slane %v1513, %v1520
  %v1523 = vunpack.c.l.s4 1983009808
  %v1524 = vunpack.c.0.s8 %v1523
  %v1525 = vlaneseq
  %v1526 = vshrl.u32 %v1525, 7
  %v1527 = vsub.s32 %v1524, %v1526
  %v1528 = vrot.slane %v1514, %v1527
  %v1529 = vcombine.low %v1521, %v1528
  %v1530 = vcombine.low %v1501, %v1503
  %v1532 = vunpack.c.l.s4 1983009808
  %v1533 = vunpack.c.0.s8 %v1532
  %v1534 = vlaneseq
  %v1535 = vshrl.u32 %v1534, 7
  %v1536 = vsub.s32 %v1533, %v1535
  %v1537 = vrot.slane %v1530, %v1536
  %v1539 = vunpack.c.l.s4 1983009808
  %v1540 = vunpack.c.0.s8 %v1539
  %v1541 = vlaneseq
  %v1542 = vshrl.u32 %v1541, 7
  %v1543 = vsub.s32 %v1540, %v1542
  %v1544 = vrot.slane %v1505, %v1543
  %v1545 = vcombine.low %v1537, %v1544
  %1548 = vst [vmem:[%s14] sm:$0xff] %v1529
  %vm1549 = vcmask 1041408
  %vm1550 = vcmask 1043458
  %vm1551 = vmor %vm1550, %vm1549
  %vm1552 = vcmask 128004
  %vm1553 = vmor %vm1552, %vm1551
  %1554 = vst.msk [vmem:[%s14 + $0x8] sm:$0x3f] %vm1553, %v1545
  // Predicated region
  $region58: #{vae_linear_forward.1} parent=0 // pred_check
    _
  $region59: #{vae_linear_forward.1} parent=0 // pred_check_branch
    %1556 = sbr.rel (0) target = $region61
  $region60: #{vae_linear_forward.1} parent=0 // pred_region
    _
  $region61: #{vae_linear_forward.1} parent=0 // pred_fallthru
    _
  // Predicated region
  $region62: #{vae_linear_forward.1} parent=0 // pred_check
    _
  $region63: #{vae_linear_forward.1} parent=0 // pred_check_branch
    %1558 = sbr.rel (0) target = $region65
  $region64: #{vae_linear_forward.1} parent=0 // pred_region
    _
  $region65: #{vae_linear_forward.1} parent=0 // pred_fallthru
    _
  // Predicated region
  $region66: #{vae_linear_forward.1} parent=0 // pred_check
    _
  $region67: #{vae_linear_forward.1} parent=0 // pred_check_branch
    %1560 = sbr.rel (0) target = $region69
  $region68: #{vae_linear_forward.1} parent=0 // pred_region
    _
  $region69: #{vae_linear_forward.1} parent=0 // pred_fallthru
    _
  // Predicated region
  $region70: #{vae_linear_forward.1} parent=0 // pred_check
    _
  $region71: #{vae_linear_forward.1} parent=0 // pred_check_branch
    %1562 = sbr.rel (0) target = $region73
  $region72: #{vae_linear_forward.1} parent=0 // pred_region
    _
  $region73: #{vae_linear_forward.1} parent=0 // pred_fallthru
    _
  // Predicated region
  $region74: #{vae_linear_forward.1} parent=0 // pred_check
    _
  $region75: #{vae_linear_forward.1} parent=0 // pred_check_branch
    %1564 = sbr.rel (0) target = $region77
  $region76: #{vae_linear_forward.1} parent=0 // pred_region
    _
  $region77: #{vae_linear_forward.1} parent=0 // pred_fallthru
    _
  // Predicated region
  $region78: #{vae_linear_forward.1} parent=0 // pred_check
    _
  $region79: #{vae_linear_forward.1} parent=0 // pred_check_branch
    %1566 = sbr.rel (0) target = $region81
  $region80: #{vae_linear_forward.1} parent=0 // pred_region
    _
  $region81: #{vae_linear_forward.1} parent=0 // pred_fallthru
    _

</llo_original>
